<compile_context>
chip_gen: v7x
topology: tpu7x:2x2x1
jax: 0.10.0
libtpu: 0.0.40
codegen_flags: <defaults>
</compile_context>

<pallas_src>
import jax
import jax.numpy as jnp
from jax.experimental import pallas as pl
from jax.experimental.pallas import tpu as pltpu

HID = 128          # hid_dim
IMG_FEAT = 1000    # output dim of the pretrained image backbone
N_CLASSES = 108    # classifier output
OUT_PAD = 128      # 108 padded to a full lane tile
TK = 512           # pixel-axis K tile: 512*128*2B = 128 KiB per weight buffer


def _round_up(x, m):
    return (x + m - 1) // m * m


# ---------------------------------------------------------------------------
# Fused Pallas kernel: the whole ClsModel hot path after the token-embedding
# gather.  Grid axis 0 streams the (folded) image-projection weight along the
# pixel axis into an f32 accumulator; the tiny tail matmuls run on the final
# grid step.
#   img_h  = img_flat @ Wfold + bfold                      # img_model + img_ln
#   drug_h = drug_emb @ Wdrug + bdrug                      # drug_ln
#   pres   = seg @ drug_h                                  # pad_sequence + sum(dim=1)
#   h      = tanh(img_h @ W1a + pres @ W1b + b1)           # classifier[0..1]
#   out    = h @ W2 + b2                                   # classifier[3]
# ---------------------------------------------------------------------------
def cls_kernel(img_ref, wimg_ref, bimg_ref, drug_ref, seg_ref,
               wdrug_ref, bdrug_ref, w1a_ref, w1b_ref, b1_ref,
               w2_ref, b2_ref, out_ref, acc_ref):
    f32 = jnp.float32
    k = pl.program_id(0)

    @pl.when(k == 0)
    def _init():
        acc_ref[...] = jnp.zeros_like(acc_ref)

    # streamed reduction over the pixel axis (bf16 operands, f32 accumulation)
    acc_ref[...] += jnp.dot(img_ref[...], wimg_ref[...],
                            preferred_element_type=f32)

    @pl.when(k == pl.num_programs(0) - 1)
    def _finalize():
        # img_model + img_ln (folded); Dropout = identity in eval
        img_h = acc_ref[...] + bimg_ref[...]
        # drug_ln: Linear(2H, H) on the per-drug text features
        drug_h = jnp.dot(drug_ref[...], wdrug_ref[...],
                         preferred_element_type=f32) + bdrug_ref[...]
        # padding(drugs, num_drugs) followed by drugs.sum(dim=1) == segment sum,
        # expressed as a (B, N_total) 0/1 matrix times drug_h.
        pres = jnp.dot(seg_ref[...], drug_h, preferred_element_type=f32)
        # classifier: Linear(2H,2H) on cat([img_h, pres]) -> Tanh -> Linear(2H,108)
        # (concat avoided by splitting W1 into its img / pres row-halves)
        h = jnp.tanh(jnp.dot(img_h, w1a_ref[...], preferred_element_type=f32)
                     + jnp.dot(pres, w1b_ref[...], preferred_element_type=f32)
                     + b1_ref[...])
        out_ref[...] = jnp.dot(h, w2_ref[...],
                               preferred_element_type=f32) + b2_ref[...]


def init_params(key, n_vocabs, in_pixels):
    """Module-faithful parameters (f32, unpadded)."""
    ks = jax.random.split(key, 8)
    s = 0.02
    return {
        # TODO(synk): stand-in for the external pretrained image backbone.
        "w0": s * jax.random.normal(ks[0], (in_pixels, IMG_FEAT), jnp.float32),
        "b0": jnp.zeros((1, IMG_FEAT), jnp.float32),
        # img_ln: Linear(1000, hid_dim)
        "w_img": s * jax.random.normal(ks[1], (IMG_FEAT, HID), jnp.float32),
        "b_img": jnp.zeros((1, HID), jnp.float32),
        # TODO(synk): TextEncoder internals unspecified; stand-in = embedding
        # table + masked mean pooling (done in the wrapper).
        "emb_table": s * jax.random.normal(ks[2], (n_vocabs, 2 * HID), jnp.float32),
        # drug_ln: Linear(2*hid_dim, hid_dim)
        "w_drug": s * jax.random.normal(ks[3], (2 * HID, HID), jnp.float32),
        "b_drug": jnp.zeros((1, HID), jnp.float32),
        # classifier[0]: Linear(2H, 2H), split row-wise into img / pres halves
        "w1a": s * jax.random.normal(ks[4], (HID, 2 * HID), jnp.float32),
        "w1b": s * jax.random.normal(ks[5], (HID, 2 * HID), jnp.float32),
        "b1": jnp.zeros((1, 2 * HID), jnp.float32),
        # classifier[3]: Linear(2H, 108)
        "w2": s * jax.random.normal(ks[6], (2 * HID, N_CLASSES), jnp.float32),
        "b2": jnp.zeros((1, N_CLASSES), jnp.float32),
    }


def prepare_inference_params(params, in_pixels):
    """One-time offline precompute for the Pallas kernel.

    * folds the (linear) backbone stand-in + img_ln into one (in_pixels, HID)
      projection, stored bf16 and zero-padded so the pixel axis is a multiple
      of the K tile (skip the fold if the real backbone is non-linear),
    * zero-pads the classifier output to 128 lanes.
    """
    p = dict(params)
    tk = min(TK, _round_up(in_pixels, 128))
    p_pad = _round_up(in_pixels, tk)
    w_fold = params["w0"] @ params["w_img"]                       # (P, HID) f32
    b_fold = params["b0"] @ params["w_img"] + params["b_img"]     # (1, HID) f32
    p["w_imgproj"] = jnp.pad(w_fold.astype(jnp.bfloat16),
                             ((0, p_pad - in_pixels), (0, 0)))
    p["b_imgproj"] = b_fold
    p["w2_pad"] = jnp.pad(params["w2"], ((0, 0), (0, OUT_PAD - N_CLASSES)))
    p["b2_pad"] = jnp.pad(params["b2"], ((0, 0), (0, OUT_PAD - N_CLASSES)))
    return p


def _segment_matrix(n_total, num_drugs):
    """seg[b, n] = 1 iff drug n belongs to sample b (replaces pad_sequence+sum)."""
    offsets = jnp.concatenate([jnp.zeros((1,), jnp.int32),
                               jnp.cumsum(num_drugs)[:-1]])
    idx = jnp.arange(n_total, dtype=jnp.int32)[None, :]
    return ((idx >= offsets[:, None]) &
            (idx < (offsets + num_drugs)[:, None])).astype(jnp.float32)


def cls_model_forward(img, drug_ids, drug_mask, num_drugs, params):
    """JAX glue (flatten / embedding gather / segment matrix / padding) + Pallas."""
    B = img.shape[0]
    img_flat = img.reshape(B, -1)
    n_pix = img_flat.shape[1]

    # TextEncoder stand-in: embedding lookup + masked mean pool -> (N, 2H)
    tok = jnp.take(params["emb_table"], drug_ids, axis=0)
    m = drug_mask.astype(jnp.float32)[..., None]
    drug_emb = (tok * m).sum(axis=1) / jnp.maximum(m.sum(axis=1), 1.0)

    n_total = drug_ids.shape[0]
    seg = _segment_matrix(n_total, num_drugs)

    # pad to MXU / lane friendly shapes (all static)
    p_pad = params["w_imgproj"].shape[0]
    tk = min(TK, p_pad)
    assert p_pad % tk == 0 and p_pad >= n_pix
    b_pad = _round_up(max(B, 8), 8)
    n_pad = _round_up(max(n_total, 8), 8)

    img_p = jnp.pad(img_flat.astype(jnp.bfloat16),
                    ((0, b_pad - B), (0, p_pad - n_pix)))
    drug_p = jnp.pad(drug_emb, ((0, n_pad - n_total), (0, 0)))
    seg_p = jnp.pad(seg, ((0, b_pad - B), (0, n_pad - n_total)))

    n_k = p_pad // tk
    const = lambda k: (0, 0)

    cost = pl.CostEstimate(
        flops=(2 * b_pad * p_pad * HID
               + 2 * n_pad * 2 * HID * HID
               + 2 * b_pad * n_pad * HID
               + 2 * b_pad * HID * 2 * HID * 2
               + 2 * b_pad * 2 * HID * OUT_PAD),
        transcendentals=b_pad * 2 * HID,
        bytes_accessed=(2 * (b_pad * p_pad + p_pad * HID)
                        + 4 * (n_pad * 2 * HID + b_pad * n_pad
                               + 2 * HID * HID + 2 * 2 * HID * 2 * HID
                               + 2 * HID * OUT_PAD + b_pad * OUT_PAD)),
    )

    out = pl.pallas_call(
        cls_kernel,
        out_shape=jax.ShapeDtypeStruct((b_pad, OUT_PAD), jnp.float32),
        grid=(n_k,),
        in_specs=[
            pl.BlockSpec((b_pad, tk), lambda k: (0, k)),       # img pixel tiles
            pl.BlockSpec((tk, HID), lambda k: (k, 0)),         # folded img proj (bf16)
            pl.BlockSpec((1, HID), const),                     # folded img bias
            pl.BlockSpec((n_pad, 2 * HID), const),             # drug_emb
            pl.BlockSpec((b_pad, n_pad), const),               # segment matrix
            pl.BlockSpec((2 * HID, HID), const),               # w_drug
            pl.BlockSpec((1, HID), const),                     # b_drug
            pl.BlockSpec((HID, 2 * HID), const),               # w1a (img half)
            pl.BlockSpec((HID, 2 * HID), const),               # w1b (pres half)
            pl.BlockSpec((1, 2 * HID), const),                 # b1
            pl.BlockSpec((2 * HID, OUT_PAD), const),           # w2 (lane-padded)
            pl.BlockSpec((1, OUT_PAD), const),                 # b2 (lane-padded)
        ],
        out_specs=pl.BlockSpec((b_pad, OUT_PAD), const),
        scratch_shapes=[pltpu.VMEM((b_pad, HID), jnp.float32)],
        compiler_params=pltpu.CompilerParams(
            dimension_semantics=("arbitrary",),   # reduction axis
            vmem_limit_bytes=32 * 1024 * 1024),
        cost_estimate=cost,
    )(img_p, params["w_imgproj"], params["b_imgproj"],
      drug_p, seg_p,
      params["w_drug"], params["b_drug"],
      params["w1a"], params["w1b"], params["b1"],
      params["w2_pad"], params["b2_pad"])

    return out[:B, :N_CLASSES]


def reference_forward(img, drug_ids, drug_mask, num_drugs, params):
    """Plain-JAX reference using the same (folded, bf16-rounded) numerics."""
    B = img.shape[0]
    img_flat = img.reshape(B, -1).astype(jnp.bfloat16).astype(jnp.float32)
    n_pix = img_flat.shape[1]
    w_img = params["w_imgproj"][:n_pix].astype(jnp.float32)
    img_h = img_flat @ w_img + params["b_imgproj"]
    tok = jnp.take(params["emb_table"], drug_ids, axis=0)
    m = drug_mask.astype(jnp.float32)[..., None]
    drug_emb = (tok * m).sum(axis=1) / jnp.maximum(m.sum(axis=1), 1.0)
    drug_h = drug_emb @ params["w_drug"] + params["b_drug"]
    seg = _segment_matrix(drug_ids.shape[0], num_drugs)
    pres = seg @ drug_h
    h = jnp.tanh(img_h @ params["w1a"] + pres @ params["w1b"] + params["b1"])
    return h @ params["w2"] + params["b2"]


if __name__ == "__main__":
    key = jax.random.PRNGKey(0)
    k_img, k_ids, k_msk, k_par = jax.random.split(key, 4)

    B, C, H, W = 2, 3, 16, 16
    n_vocabs = 50
    seq_len = 8
    num_drugs = jnp.array([3, 2], dtype=jnp.int32)   # per-sample drug counts
    n_total = 5                                      # sum(num_drugs)

    img = jax.random.normal(k_img, (B, C, H, W), jnp.float32)          # NCHW
    drug_ids = jax.random.randint(k_ids, (n_total, seq_len), 0, n_vocabs)
    drug_mask = (jax.random.uniform(k_msk, (n_total, seq_len)) > 0.2
                 ).astype(jnp.int32)

    params = prepare_inference_params(
        init_params(k_par, n_vocabs, C * H * W), C * H * W)

    out = jax.jit(cls_model_forward)(img, drug_ids, drug_mask, num_drugs, params)
    jax.block_until_ready(out)

    ref = reference_forward(img, drug_ids, drug_mask, num_drugs, params)
    assert out.shape == (B, N_CLASSES)
    assert jnp.allclose(out, ref, atol=2e-3, rtol=2e-2), \
        float(jnp.max(jnp.abs(out - ref)))
    print("KERNEL_OK")
</pallas_src>

<mosaic_0001>
module attributes {stable_mosaic.version = 11 : i64} {
  func.func @cls_kernel(%arg0: i32, %arg1: memref<8x512xbf16, #tpu.memory_space<vmem>>, %arg2: memref<512x128xbf16, #tpu.memory_space<vmem>>, %arg3: memref<1x128xf32, #tpu.memory_space<vmem>>, %arg4: memref<8x256xf32, #tpu.memory_space<vmem>>, %arg5: memref<8x8xf32, #tpu.memory_space<vmem>>, %arg6: memref<256x128xf32, #tpu.memory_space<vmem>>, %arg7: memref<1x128xf32, #tpu.memory_space<vmem>>, %arg8: memref<128x256xf32, #tpu.memory_space<vmem>>, %arg9: memref<128x256xf32, #tpu.memory_space<vmem>>, %arg10: memref<1x256xf32, #tpu.memory_space<vmem>>, %arg11: memref<256x128xf32, #tpu.memory_space<vmem>>, %arg12: memref<1x128xf32, #tpu.memory_space<vmem>>, %arg13: memref<8x128xf32, #tpu.memory_space<vmem>>, %arg14: memref<8x128xf32, #tpu.memory_space<vmem>>) attributes {dimension_semantics = [#tpu.dimension_semantics<arbitrary>], iteration_bounds = array<i64: 2>, scalar_prefetch = 0 : i64, scratch_operands = 1 : i64, tpu.core_type = #tpu.core_type<tc>, window_params = [{transform_indices = @transform_0, window_bounds = array<i64: 8, 512>}, {transform_indices = @transform_1, window_bounds = array<i64: 512, 128>}, {pipeline_mode = #tpu.pipeline_mode<synchronous>, transform_indices = @transform_2, window_bounds = array<i64: 1, 128>}, {pipeline_mode = #tpu.pipeline_mode<synchronous>, transform_indices = @transform_3, window_bounds = array<i64: 8, 256>}, {pipeline_mode = #tpu.pipeline_mode<synchronous>, transform_indices = @transform_4, window_bounds = array<i64: 8, 8>}, {pipeline_mode = #tpu.pipeline_mode<synchronous>, transform_indices = @transform_5, window_bounds = array<i64: 256, 128>}, {pipeline_mode = #tpu.pipeline_mode<synchronous>, transform_indices = @transform_6, window_bounds = array<i64: 1, 128>}, {pipeline_mode = #tpu.pipeline_mode<synchronous>, transform_indices = @transform_7, window_bounds = array<i64: 128, 256>}, {pipeline_mode = #tpu.pipeline_mode<synchronous>, transform_indices = @transform_8, window_bounds = array<i64: 128, 256>}, {pipeline_mode = #tpu.pipeline_mode<synchronous>, transform_indices = @transform_9, window_bounds = array<i64: 1, 256>}, {pipeline_mode = #tpu.pipeline_mode<synchronous>, transform_indices = @transform_10, window_bounds = array<i64: 256, 128>}, {pipeline_mode = #tpu.pipeline_mode<synchronous>, transform_indices = @transform_11, window_bounds = array<i64: 1, 128>}, {pipeline_mode = #tpu.pipeline_mode<synchronous>, transform_indices = @transform_12, window_bounds = array<i64: 8, 128>}]} {
    %c0_i32 = arith.constant 0 : i32
    %0 = arith.cmpi eq, %arg0, %c0_i32 : i32
    %1 = arith.extui %0 : i1 to i32
    %c0_i32_0 = arith.constant 0 : i32
    %2 = arith.cmpi ne, %1, %c0_i32_0 : i32
    scf.if %2 {
      %cst_9 = arith.constant 0.000000e+00 : f32
      %12 = vector.broadcast %cst_9 : f32 to vector<8x128xf32>
      %c0_10 = arith.constant 0 : index
      %c0_11 = arith.constant 0 : index
      %13 = vector.load %arg14[%c0_10, %c0_11] : memref<8x128xf32, #tpu.memory_space<vmem>>, vector<8x128xf32>
      tpu.vector_store %arg14[%c0_10, %c0_11], %12 {strides = array<i32>} : memref<8x128xf32, #tpu.memory_space<vmem>>, vector<8x128xf32>,
    } else {
    }
    %c0 = arith.constant 0 : index
    %c0_1 = arith.constant 0 : index
    %3 = vector.load %arg14[%c0, %c0_1] : memref<8x128xf32, #tpu.memory_space<vmem>>, vector<8x128xf32>
    %c0_2 = arith.constant 0 : index
    %c0_3 = arith.constant 0 : index
    %4 = vector.load %arg1[%c0_2, %c0_3] : memref<8x512xbf16, #tpu.memory_space<vmem>>, vector<8x512xbf16>
    %c0_4 = arith.constant 0 : index
    %c0_5 = arith.constant 0 : index
    %5 = vector.load %arg2[%c0_4, %c0_5] : memref<512x128xbf16, #tpu.memory_space<vmem>>, vector<512x128xbf16>
    %cst = arith.constant dense<0.000000e+00> : vector<8x128xf32>
    %6 = tpu.matmul %4, %5, %cst {dimension_numbers = #tpu.dot_dimension_numbers<[1], [0], [0], [1], [0, 0, 1, 1], [], []>} : vector<8x512xbf16>, vector<512x128xbf16>, vector<8x128xf32> -> vector<8x128xf32>
    %7 = arith.addf %3, %6 : vector<8x128xf32>
    %c0_6 = arith.constant 0 : index
    %c0_7 = arith.constant 0 : index
    %8 = vector.load %arg14[%c0_6, %c0_7] : memref<8x128xf32, #tpu.memory_space<vmem>>, vector<8x128xf32>
    tpu.vector_store %arg14[%c0_6, %c0_7], %7 {strides = array<i32>} : memref<8x128xf32, #tpu.memory_space<vmem>>, vector<8x128xf32>,
    %c1_i32 = arith.constant 1 : i32
    %9 = arith.cmpi eq, %arg0, %c1_i32 : i32
    %10 = arith.extui %9 : i1 to i32
    %c0_i32_8 = arith.constant 0 : i32
    %11 = arith.cmpi ne, %10, %c0_i32_8 : i32
    scf.if %11 {
      %c0_9 = arith.constant 0 : index
      %c0_10 = arith.constant 0 : index
      %12 = vector.load %arg14[%c0_9, %c0_10] : memref<8x128xf32, #tpu.memory_space<vmem>>, vector<8x128xf32>
      %c0_11 = arith.constant 0 : index
      %c0_12 = arith.constant 0 : index
      %13 = vector.load %arg3[%c0_11, %c0_12] : memref<1x128xf32, #tpu.memory_space<vmem>>, vector<1x128xf32>
      %14 = vector.broadcast %13 : vector<1x128xf32> to vector<8x128xf32>
      %15 = arith.addf %12, %14 : vector<8x128xf32>
      %c0_13 = arith.constant 0 : index
      %c0_14 = arith.constant 0 : index
      %16 = vector.load %arg4[%c0_13, %c0_14] : memref<8x256xf32, #tpu.memory_space<vmem>>, vector<8x256xf32>
      %c0_15 = arith.constant 0 : index
      %c0_16 = arith.constant 0 : index
      %17 = vector.load %arg6[%c0_15, %c0_16] : memref<256x128xf32, #tpu.memory_space<vmem>>, vector<256x128xf32>
      %cst_17 = arith.constant dense<0.000000e+00> : vector<8x128xf32>
      %18 = tpu.matmul %16, %17, %cst_17 {dimension_numbers = #tpu.dot_dimension_numbers<[1], [0], [0], [1], [0, 0, 1, 1], [], []>} : vector<8x256xf32>, vector<256x128xf32>, vector<8x128xf32> -> vector<8x128xf32>
      %c0_18 = arith.constant 0 : index
      %c0_19 = arith.constant 0 : index
      %19 = vector.load %arg7[%c0_18, %c0_19] : memref<1x128xf32, #tpu.memory_space<vmem>>, vector<1x128xf32>
      %20 = vector.broadcast %19 : vector<1x128xf32> to vector<8x128xf32>
      %21 = arith.addf %18, %20 : vector<8x128xf32>
      %c0_20 = arith.constant 0 : index
      %c0_21 = arith.constant 0 : index
      %22 = vector.load %arg5[%c0_20, %c0_21] : memref<8x8xf32, #tpu.memory_space<vmem>>, vector<8x8xf32>
      %cst_22 = arith.constant dense<0.000000e+00> : vector<8x128xf32>
      %23 = tpu.matmul %22, %21, %cst_22 {dimension_numbers = #tpu.dot_dimension_numbers<[1], [0], [0], [1], [0, 0, 1, 1], [], []>} : vector<8x8xf32>, vector<8x128xf32>, vector<8x128xf32> -> vector<8x128xf32>
      %c0_23 = arith.constant 0 : index
      %c0_24 = arith.constant 0 : index
      %24 = vector.load %arg8[%c0_23, %c0_24] : memref<128x256xf32, #tpu.memory_space<vmem>>, vector<128x256xf32>
      %cst_25 = arith.constant dense<0.000000e+00> : vector<8x256xf32>
      %25 = tpu.matmul %15, %24, %cst_25 {dimension_numbers = #tpu.dot_dimension_numbers<[1], [0], [0], [1], [0, 0, 1, 1], [], []>} : vector<8x128xf32>, vector<128x256xf32>, vector<8x256xf32> -> vector<8x256xf32>
      %c0_26 = arith.constant 0 : index
      %c0_27 = arith.constant 0 : index
      %26 = vector.load %arg9[%c0_26, %c0_27] : memref<128x256xf32, #tpu.memory_space<vmem>>, vector<128x256xf32>
      %cst_28 = arith.constant dense<0.000000e+00> : vector<8x256xf32>
      %27 = tpu.matmul %23, %26, %cst_28 {dimension_numbers = #tpu.dot_dimension_numbers<[1], [0], [0], [1], [0, 0, 1, 1], [], []>} : vector<8x128xf32>, vector<128x256xf32>, vector<8x256xf32> -> vector<8x256xf32>
      %28 = arith.addf %25, %27 : vector<8x256xf32>
      %c0_29 = arith.constant 0 : index
      %c0_30 = arith.constant 0 : index
      %29 = vector.load %arg10[%c0_29, %c0_30] : memref<1x256xf32, #tpu.memory_space<vmem>>, vector<1x256xf32>
      %30 = vector.broadcast %29 : vector<1x256xf32> to vector<8x256xf32>
      %31 = arith.addf %28, %30 : vector<8x256xf32>
      %32 = math.tanh %31 : vector<8x256xf32>
      %c0_31 = arith.constant 0 : index
      %c0_32 = arith.constant 0 : index
      %33 = vector.load %arg11[%c0_31, %c0_32] : memref<256x128xf32, #tpu.memory_space<vmem>>, vector<256x128xf32>
      %cst_33 = arith.constant dense<0.000000e+00> : vector<8x128xf32>
      %34 = tpu.matmul %32, %33, %cst_33 {dimension_numbers = #tpu.dot_dimension_numbers<[1], [0], [0], [1], [0, 0, 1, 1], [], []>} : vector<8x256xf32>, vector<256x128xf32>, vector<8x128xf32> -> vector<8x128xf32>
      %c0_34 = arith.constant 0 : index
      %c0_35 = arith.constant 0 : index
      %35 = vector.load %arg12[%c0_34, %c0_35] : memref<1x128xf32, #tpu.memory_space<vmem>>, vector<1x128xf32>
      %36 = vector.broadcast %35 : vector<1x128xf32> to vector<8x128xf32>
      %37 = arith.addf %34, %36 : vector<8x128xf32>
      %c0_36 = arith.constant 0 : index
      %c0_37 = arith.constant 0 : index
      %38 = vector.load %arg13[%c0_36, %c0_37] : memref<8x128xf32, #tpu.memory_space<vmem>>, vector<8x128xf32>
      tpu.vector_store %arg13[%c0_36, %c0_37], %37 {strides = array<i32>} : memref<8x128xf32, #tpu.memory_space<vmem>>, vector<8x128xf32>,
    } else {
    }
    return
  }
  func.func @transform_0(%arg0: i32) -> (i32, i32) {
    %c0_i32 = arith.constant 0 : i32
    %c0_i32_0 = arith.constant 0 : i32
    return %c0_i32, %arg0 : i32, i32
  }
  func.func @transform_1(%arg0: i32) -> (i32, i32) {
    %c0_i32 = arith.constant 0 : i32
    %c0_i32_0 = arith.constant 0 : i32
    return %arg0, %c0_i32 : i32, i32
  }
  func.func @transform_2(%arg0: i32) -> (i32, i32) {
    %c0_i32 = arith.constant 0 : i32
    %c0_i32_0 = arith.constant 0 : i32
    %c0_i32_1 = arith.constant 0 : i32
    return %c0_i32, %c0_i32_0 : i32, i32
  }
  func.func @transform_3(%arg0: i32) -> (i32, i32) {
    %c0_i32 = arith.constant 0 : i32
    %c0_i32_0 = arith.constant 0 : i32
    %c0_i32_1 = arith.constant 0 : i32
    return %c0_i32, %c0_i32_0 : i32, i32
  }
  func.func @transform_4(%arg0: i32) -> (i32, i32) {
    %c0_i32 = arith.constant 0 : i32
    %c0_i32_0 = arith.constant 0 : i32
    %c0_i32_1 = arith.constant 0 : i32
    return %c0_i32, %c0_i32_0 : i32, i32
  }
  func.func @transform_5(%arg0: i32) -> (i32, i32) {
    %c0_i32 = arith.constant 0 : i32
    %c0_i32_0 = arith.constant 0 : i32
    %c0_i32_1 = arith.constant 0 : i32
    return %c0_i32, %c0_i32_0 : i32, i32
  }
  func.func @transform_6(%arg0: i32) -> (i32, i32) {
    %c0_i32 = arith.constant 0 : i32
    %c0_i32_0 = arith.constant 0 : i32
    %c0_i32_1 = arith.constant 0 : i32
    return %c0_i32, %c0_i32_0 : i32, i32
  }
  func.func @transform_7(%arg0: i32) -> (i32, i32) {
    %c0_i32 = arith.constant 0 : i32
    %c0_i32_0 = arith.constant 0 : i32
    %c0_i32_1 = arith.constant 0 : i32
    return %c0_i32, %c0_i32_0 : i32, i32
  }
  func.func @transform_8(%arg0: i32) -> (i32, i32) {
    %c0_i32 = arith.constant 0 : i32
    %c0_i32_0 = arith.constant 0 : i32
    %c0_i32_1 = arith.constant 0 : i32
    return %c0_i32, %c0_i32_0 : i32, i32
  }
  func.func @transform_9(%arg0: i32) -> (i32, i32) {
    %c0_i32 = arith.constant 0 : i32
    %c0_i32_0 = arith.constant 0 : i32
    %c0_i32_1 = arith.constant 0 : i32
    return %c0_i32, %c0_i32_0 : i32, i32
  }
  func.func @transform_10(%arg0: i32) -> (i32, i32) {
    %c0_i32 = arith.constant 0 : i32
    %c0_i32_0 = arith.constant 0 : i32
    %c0_i32_1 = arith.constant 0 : i32
    return %c0_i32, %c0_i32_0 : i32, i32
  }
  func.func @transform_11(%arg0: i32) -> (i32, i32) {
    %c0_i32 = arith.constant 0 : i32
    %c0_i32_0 = arith.constant 0 : i32
    %c0_i32_1 = arith.constant 0 : i32
    return %c0_i32, %c0_i32_0 : i32, i32
  }
  func.func @transform_12(%arg0: i32) -> (i32, i32) {
    %c0_i32 = arith.constant 0 : i32
    %c0_i32_0 = arith.constant 0 : i32
    %c0_i32_1 = arith.constant 0 : i32
    return %c0_i32, %c0_i32_0 : i32, i32
  }
}

</mosaic_0001>

<llo_original>
// kernel: cls_model_forward.1
$region0: #{cls_model_forward.1}
  #allocation0 [shape = 'u32[]', space=smem, size = 0x4, offset = 0x4, fixed_abs, tag = 'smem constant byte address 0x4 - core index']
  #allocation1 [shape = 'u32[144,128]{1,0:T(1,128)}', space=vmem, size = 0x12000, scoped, tag = 'internal scratch']
  #allocation2 [shape = 'f32[8,128]{1,0:T(8,128)}', space=vmem, size = 0x1000, scoped, tag = 'scratch operand']
  %s0 = inlined_call_operand.vmem [shape: bf16[8,1024], index: 0, kind: input, shape index: {}]
  %s1 = inlined_call_operand.vmem [shape: bf16[1024,128], index: 1, kind: input, shape index: {}]
  %s2 = inlined_call_operand.vmem [shape: f32[1,128], index: 2, kind: input, shape index: {}]
  %s3 = inlined_call_operand.vmem [shape: f32[8,256], index: 3, kind: input, shape index: {}]
  %s4 = inlined_call_operand.vmem [shape: f32[8,8], index: 4, kind: input, shape index: {}]
  %s5 = inlined_call_operand.vmem [shape: f32[256,128], index: 5, kind: input, shape index: {}]
  %s6 = inlined_call_operand.vmem [shape: f32[1,128], index: 6, kind: input, shape index: {}]
  %s7 = inlined_call_operand.vmem [shape: f32[128,256], index: 7, kind: input, shape index: {}]
  %s8 = inlined_call_operand.hbm [shape: f32[128,256], index: 8, kind: input, shape index: {}]
  %s9 = inlined_call_operand.vmem [shape: f32[1,256], index: 9, kind: input, shape index: {}]
  %s10 = inlined_call_operand.hbm [shape: f32[256,128], index: 10, kind: input, shape index: {}]
  %s11 = inlined_call_operand.vmem [shape: f32[1,128], index: 11, kind: input, shape index: {}]
  %s12 = inlined_call_operand.vmem [shape: f32[8,128], index: 12, kind: output, shape index: {}]
  %s13 = sld [smem:[#allocation0]]
  $region97: #{cls_model_forward.1} parent=0
    _
  %s15 = ssub.s32 1, %s13
  %s16 = scalar_select 0, %s15, %s13
  $region1: #{cls_model_forward.1} parent=0
    #allocation3 [shape = 'u8[131072]{0}', space=vmem, size = 0x20000, scoped, tag = 'input window, operand 8, single buffered']
    #allocation4 [shape = 's32[2]{0}', space=sflag, size = 0x8, scoped, tag = 'scoped memory for cls_model_forward.1']
    #allocation5 [shape = 'u8[131072]{0}', space=vmem, size = 0x20000, scoped, tag = 'input window, operand 10, single buffered']
    #allocation6 [shape = 's32[1]{0}', space=sflag, size = 0x4, scoped, tag = 'scoped memory for cls_model_forward.1']
    %17 = vsyncpa [#allocation4], 0
    %18 = vsyncpa [#allocation6], 0
    loop: start=0, step=1, limit=4
    $region2: #{cls_model_forward.1} parent=1 // loop_pre_header
      _
    $region3: #{cls_model_forward.1} parent=1 // loop_header
      %s20 = sphi 0, %s24
      %p21 = scmp.ge.s32.totalorder %s20, 4
      %s30 = sphi 0, %s32
      %s33 = sphi 0, %s30
      %s34 = sphi 0, %s33
      %s50 = sphi 0, %s34
      %s56 = sphi 0, %s58
      %s59 = sphi 0, %s56
      %s60 = sphi 0, %s59
      %s76 = sphi 0, %s60
      %s80 = sphi 0, %s80
      %s82 = sphi 0, %s80
      %s83 = sphi 0, %s82
      %s97 = sphi 0, %s83
      %s101 = sphi 0, %s101
      %s103 = sphi 0, %s101
      %s104 = sphi 0, %s103
      %s118 = sphi 0, %s104
      %s122 = sphi 0, %s122
      %s124 = sphi 0, %s122
      %s125 = sphi 0, %s124
      %s139 = sphi 0, %s125
      %s143 = sphi 0, %s143
      %s145 = sphi 0, %s143
      %s146 = sphi 0, %s145
      %s160 = sphi 0, %s146
      %s164 = sphi 0, %s164
      %s166 = sphi 0, %s164
      %s167 = sphi 0, %s166
      %s181 = sphi 0, %s167
      %s185 = sphi 0, %s185
      %s187 = sphi 0, %s185
      %s188 = sphi 0, %s187
      %s202 = sphi 0, %s188
      %s206 = sphi 0, %s206
      %s208 = sphi 0, %s206
      %s209 = sphi 0, %s208
      %s223 = sphi 0, %s209
      %s227 = sphi 0, %s227
      %s229 = sphi 0, %s227
      %s230 = sphi 0, %s229
      %s244 = sphi 0, %s230
      %s248 = sphi 0, %s248
      %s250 = sphi 0, %s248
      %s251 = sphi 0, %s250
      %s265 = sphi 0, %s251
      %s269 = sphi 0, %s269
      %s271 = sphi 0, %s269
      %s272 = sphi 0, %s271
      %s286 = sphi 0, %s272
      %s290 = sphi 0, %s290
      %s292 = sphi 0, %s290
      %s293 = sphi 0, %s292
      %s307 = sphi 0, %s293
    $region4: #{cls_model_forward.1} parent=1 // loop_header_branch
      %23 = sbr.rel (%p21) target = $region8
    $region5: #{cls_model_forward.1} parent=1 // loop_body
      %s25 = ssub.s32 %s20, 1
      %s26 = ssub.s32 %s20, 2
      %s27 = sadd.s32 %s20, 1
      %s28 = ssub.s32 %s20, %s27
      %p29 = scmp.eq.s32.totalorder %s28, 0
      %s31 = sadd.s32 %s30, 1
      %s32 = scalar_select %p29, %s30, %s31
      %p35 = pneg %p29
      %p36 = scmp.eq.s32.totalorder %s20, 1
      %p37 = por %p35, %p36
      %p38 = scmp.ne.s32.totalorder %s30, %s33
      %p39 = scmp.eq.s32.totalorder %s20, 0
      %p40 = por %p38, %p39
      %p41 = scmp.ne.s32.totalorder %s30, %s33
      %p42 = scmp.eq.s32.totalorder %s25, 1
      %p43 = por %p41, %p42
      %p44 = scmp.ne.s32.totalorder %s33, %s34
      %p45 = scmp.eq.s32.totalorder %s25, 0
      %p46 = por %p44, %p45
      %p47 = scmp.ne.s32.totalorder %s33, %s34
      %p48 = scmp.eq.s32.totalorder %s26, 1
      %p49 = por %p47, %p48
      %p51 = scmp.ne.s32.totalorder %s34, %s50
      %p52 = scmp.eq.s32.totalorder %s26, 0
      %p53 = por %p51, %p52
      %s54 = ssub.s32 %s20, %s27
      %p55 = scmp.eq.s32.totalorder %s54, 0
      %s57 = sadd.s32 %s56, 1
      %s58 = scalar_select %p55, %s56, %s57
      %p61 = pneg %p55
      %p62 = scmp.eq.s32.totalorder %s20, 1
      %p63 = por %p61, %p62
      %p64 = scmp.ne.s32.totalorder %s56, %s59
      %p65 = scmp.eq.s32.totalorder %s20, 0
      %p66 = por %p64, %p65
      %p67 = scmp.ne.s32.totalorder %s56, %s59
      %p68 = scmp.eq.s32.totalorder %s25, 1
      %p69 = por %p67, %p68
      %p70 = scmp.ne.s32.totalorder %s59, %s60
      %p71 = scmp.eq.s32.totalorder %s25, 0
      %p72 = por %p70, %p71
      %p73 = scmp.ne.s32.totalorder %s59, %s60
      %p74 = scmp.eq.s32.totalorder %s26, 1
      %p75 = por %p73, %p74
      %p77 = scmp.ne.s32.totalorder %s60, %s76
      %p78 = scmp.eq.s32.totalorder %s26, 0
      %p79 = por %p77, %p78
      %s81 = sadd.s32 %s80, 1
      %p84 = scmp.eq.s32.totalorder %s20, 1
      %p85 = scmp.ne.s32.totalorder %s80, %s82
      %p86 = scmp.eq.s32.totalorder %s20, 0
      %p87 = por %p85, %p86
      %p88 = scmp.ne.s32.totalorder %s80, %s82
      %p89 = scmp.eq.s32.totalorder %s25, 1
      %p90 = por %p88, %p89
      %p91 = scmp.ne.s32.totalorder %s82, %s83
      %p92 = scmp.eq.s32.totalorder %s25, 0
      %p93 = por %p91, %p92
      %p94 = scmp.ne.s32.totalorder %s82, %s83
      %p95 = scmp.eq.s32.totalorder %s26, 1
      %p96 = por %p94, %p95
      %p98 = scmp.ne.s32.totalorder %s83, %s97
      %p99 = scmp.eq.s32.totalorder %s26, 0
      %p100 = por %p98, %p99
      %s102 = sadd.s32 %s101, 1
      %p105 = scmp.eq.s32.totalorder %s20, 1
      %p106 = scmp.ne.s32.totalorder %s101, %s103
      %p107 = scmp.eq.s32.totalorder %s20, 0
      %p108 = por %p106, %p107
      %p109 = scmp.ne.s32.totalorder %s101, %s103
      %p110 = scmp.eq.s32.totalorder %s25, 1
      %p111 = por %p109, %p110
      %p112 = scmp.ne.s32.totalorder %s103, %s104
      %p113 = scmp.eq.s32.totalorder %s25, 0
      %p114 = por %p112, %p113
      %p115 = scmp.ne.s32.totalorder %s103, %s104
      %p116 = scmp.eq.s32.totalorder %s26, 1
      %p117 = por %p115, %p116
      %p119 = scmp.ne.s32.totalorder %s104, %s118
      %p120 = scmp.eq.s32.totalorder %s26, 0
      %p121 = por %p119, %p120
      %s123 = sadd.s32 %s122, 1
      %p126 = scmp.eq.s32.totalorder %s20, 1
      %p127 = scmp.ne.s32.totalorder %s122, %s124
      %p128 = scmp.eq.s32.totalorder %s20, 0
      %p129 = por %p127, %p128
      %p130 = scmp.ne.s32.totalorder %s122, %s124
      %p131 = scmp.eq.s32.totalorder %s25, 1
      %p132 = por %p130, %p131
      %p133 = scmp.ne.s32.totalorder %s124, %s125
      %p134 = scmp.eq.s32.totalorder %s25, 0
      %p135 = por %p133, %p134
      %p136 = scmp.ne.s32.totalorder %s124, %s125
      %p137 = scmp.eq.s32.totalorder %s26, 1
      %p138 = por %p136, %p137
      %p140 = scmp.ne.s32.totalorder %s125, %s139
      %p141 = scmp.eq.s32.totalorder %s26, 0
      %p142 = por %p140, %p141
      %s144 = sadd.s32 %s143, 1
      %p147 = scmp.eq.s32.totalorder %s20, 1
      %p148 = scmp.ne.s32.totalorder %s143, %s145
      %p149 = scmp.eq.s32.totalorder %s20, 0
      %p150 = por %p148, %p149
      %p151 = scmp.ne.s32.totalorder %s143, %s145
      %p152 = scmp.eq.s32.totalorder %s25, 1
      %p153 = por %p151, %p152
      %p154 = scmp.ne.s32.totalorder %s145, %s146
      %p155 = scmp.eq.s32.totalorder %s25, 0
      %p156 = por %p154, %p155
      %p157 = scmp.ne.s32.totalorder %s145, %s146
      %p158 = scmp.eq.s32.totalorder %s26, 1
      %p159 = por %p157, %p158
      %p161 = scmp.ne.s32.totalorder %s146, %s160
      %p162 = scmp.eq.s32.totalorder %s26, 0
      %p163 = por %p161, %p162
      %s165 = sadd.s32 %s164, 1
      %p168 = scmp.eq.s32.totalorder %s20, 1
      %p169 = scmp.ne.s32.totalorder %s164, %s166
      %p170 = scmp.eq.s32.totalorder %s20, 0
      %p171 = por %p169, %p170
      %p172 = scmp.ne.s32.totalorder %s164, %s166
      %p173 = scmp.eq.s32.totalorder %s25, 1
      %p174 = por %p172, %p173
      %p175 = scmp.ne.s32.totalorder %s166, %s167
      %p176 = scmp.eq.s32.totalorder %s25, 0
      %p177 = por %p175, %p176
      %p178 = scmp.ne.s32.totalorder %s166, %s167
      %p179 = scmp.eq.s32.totalorder %s26, 1
      %p180 = por %p178, %p179
      %p182 = scmp.ne.s32.totalorder %s167, %s181
      %p183 = scmp.eq.s32.totalorder %s26, 0
      %p184 = por %p182, %p183
      %s186 = sadd.s32 %s185, 1
      %p189 = scmp.eq.s32.totalorder %s20, 1
      %p190 = scmp.ne.s32.totalorder %s185, %s187
      %p191 = scmp.eq.s32.totalorder %s20, 0
      %p192 = por %p190, %p191
      %p193 = scmp.ne.s32.totalorder %s185, %s187
      %p194 = scmp.eq.s32.totalorder %s25, 1
      %p195 = por %p193, %p194
      %p196 = scmp.ne.s32.totalorder %s187, %s188
      %p197 = scmp.eq.s32.totalorder %s25, 0
      %p198 = por %p196, %p197
      %p199 = scmp.ne.s32.totalorder %s187, %s188
      %p200 = scmp.eq.s32.totalorder %s26, 1
      %p201 = por %p199, %p200
      %p203 = scmp.ne.s32.totalorder %s188, %s202
      %p204 = scmp.eq.s32.totalorder %s26, 0
      %p205 = por %p203, %p204
      %s207 = sadd.s32 %s206, 1
      %p210 = scmp.eq.s32.totalorder %s20, 1
      %p211 = scmp.ne.s32.totalorder %s206, %s208
      %p212 = scmp.eq.s32.totalorder %s20, 0
      %p213 = por %p211, %p212
      %p214 = scmp.ne.s32.totalorder %s206, %s208
      %p215 = scmp.eq.s32.totalorder %s25, 1
      %p216 = por %p214, %p215
      %p217 = scmp.ne.s32.totalorder %s208, %s209
      %p218 = scmp.eq.s32.totalorder %s25, 0
      %p219 = por %p217, %p218
      %p220 = scmp.ne.s32.totalorder %s208, %s209
      %p221 = scmp.eq.s32.totalorder %s26, 1
      %p222 = por %p220, %p221
      %p224 = scmp.ne.s32.totalorder %s209, %s223
      %p225 = scmp.eq.s32.totalorder %s26, 0
      %p226 = por %p224, %p225
      %s228 = sadd.s32 %s227, 1
      %p231 = scmp.eq.s32.totalorder %s20, 1
      %p232 = scmp.ne.s32.totalorder %s227, %s229
      %p233 = scmp.eq.s32.totalorder %s20, 0
      %p234 = por %p232, %p233
      %p235 = scmp.ne.s32.totalorder %s227, %s229
      %p236 = scmp.eq.s32.totalorder %s25, 1
      %p237 = por %p235, %p236
      %p238 = scmp.ne.s32.totalorder %s229, %s230
      %p239 = scmp.eq.s32.totalorder %s25, 0
      %p240 = por %p238, %p239
      %p241 = scmp.ne.s32.totalorder %s229, %s230
      %p242 = scmp.eq.s32.totalorder %s26, 1
      %p243 = por %p241, %p242
      %p245 = scmp.ne.s32.totalorder %s230, %s244
      %p246 = scmp.eq.s32.totalorder %s26, 0
      %p247 = por %p245, %p246
      %s249 = sadd.s32 %s248, 1
      %p252 = scmp.eq.s32.totalorder %s20, 1
      %p253 = scmp.ne.s32.totalorder %s248, %s250
      %p254 = scmp.eq.s32.totalorder %s20, 0
      %p255 = por %p253, %p254
      %p256 = scmp.ne.s32.totalorder %s248, %s250
      %p257 = scmp.eq.s32.totalorder %s25, 1
      %p258 = por %p256, %p257
      %p259 = scmp.ne.s32.totalorder %s250, %s251
      %p260 = scmp.eq.s32.totalorder %s25, 0
      %p261 = por %p259, %p260
      %p262 = scmp.ne.s32.totalorder %s250, %s251
      %p263 = scmp.eq.s32.totalorder %s26, 1
      %p264 = por %p262, %p263
      %p266 = scmp.ne.s32.totalorder %s251, %s265
      %p267 = scmp.eq.s32.totalorder %s26, 0
      %p268 = por %p266, %p267
      %s270 = sadd.s32 %s269, 1
      %p273 = scmp.eq.s32.totalorder %s20, 1
      %p274 = scmp.ne.s32.totalorder %s269, %s271
      %p275 = scmp.eq.s32.totalorder %s20, 0
      %p276 = por %p274, %p275
      %p277 = scmp.ne.s32.totalorder %s269, %s271
      %p278 = scmp.eq.s32.totalorder %s25, 1
      %p279 = por %p277, %p278
      %p280 = scmp.ne.s32.totalorder %s271, %s272
      %p281 = scmp.eq.s32.totalorder %s25, 0
      %p282 = por %p280, %p281
      %p283 = scmp.ne.s32.totalorder %s271, %s272
      %p284 = scmp.eq.s32.totalorder %s26, 1
      %p285 = por %p283, %p284
      %p287 = scmp.ne.s32.totalorder %s272, %s286
      %p288 = scmp.eq.s32.totalorder %s26, 0
      %p289 = por %p287, %p288
      %s291 = sadd.s32 %s290, 1
      %p294 = scmp.eq.s32.totalorder %s20, 1
      %p295 = scmp.ne.s32.totalorder %s290, %s292
      %p296 = scmp.eq.s32.totalorder %s20, 0
      %p297 = por %p295, %p296
      %p298 = scmp.ne.s32.totalorder %s290, %s292
      %p299 = scmp.eq.s32.totalorder %s25, 1
      %p300 = por %p298, %p299
      %p301 = scmp.ne.s32.totalorder %s292, %s293
      %p302 = scmp.eq.s32.totalorder %s25, 0
      %p303 = por %p301, %p302
      %p304 = scmp.ne.s32.totalorder %s292, %s293
      %p305 = scmp.eq.s32.totalorder %s26, 1
      %p306 = por %p304, %p305
      %p308 = scmp.ne.s32.totalorder %s293, %s307
      %p309 = scmp.eq.s32.totalorder %s26, 0
      %p310 = por %p308, %p309
      %p311 = scmp.le.s32.totalorder 1, %s20
      %p312 = scmp.lt.s32.totalorder %s20, 3
      %p313 = pnand %p311, %p312
      %p314 = pneg %p313
      // Predicated region
      $region9: #{cls_model_forward.1} parent=5 // pred_check
        _
      $region10: #{cls_model_forward.1} parent=5 // pred_check_branch
        %316 = sbr.rel (%p313) target = $region12
      $region11: #{cls_model_forward.1} parent=5 // pred_region
        %s317 = ssub.s32 %s20, 1
        // Predicated region
        $region13: #{cls_model_forward.1} parent=11 // pred_check
          %p318 = pneg %p93
        $region14: #{cls_model_forward.1} parent=11 // pred_check_branch
          %320 = sbr.rel (%p318) target = $region16
        $region15: #{cls_model_forward.1} parent=11 // pred_region
          _
        $region16: #{cls_model_forward.1} parent=11 // pred_fallthru
          _
        // Predicated region
        $region17: #{cls_model_forward.1} parent=11 // pred_check
          %p321 = pneg %p114
        $region18: #{cls_model_forward.1} parent=11 // pred_check_branch
          %323 = sbr.rel (%p321) target = $region20
        $region19: #{cls_model_forward.1} parent=11 // pred_region
          _
        $region20: #{cls_model_forward.1} parent=11 // pred_fallthru
          _
        // Predicated region
        $region21: #{cls_model_forward.1} parent=11 // pred_check
          %p324 = pneg %p135
        $region22: #{cls_model_forward.1} parent=11 // pred_check_branch
          %326 = sbr.rel (%p324) target = $region24
        $region23: #{cls_model_forward.1} parent=11 // pred_region
          _
        $region24: #{cls_model_forward.1} parent=11 // pred_fallthru
          _
        // Predicated region
        $region25: #{cls_model_forward.1} parent=11 // pred_check
          %p327 = pneg %p156
        $region26: #{cls_model_forward.1} parent=11 // pred_check_branch
          %329 = sbr.rel (%p327) target = $region28
        $region27: #{cls_model_forward.1} parent=11 // pred_region
          _
        $region28: #{cls_model_forward.1} parent=11 // pred_fallthru
          _
        // Predicated region
        $region29: #{cls_model_forward.1} parent=11 // pred_check
          %p330 = pneg %p177
        $region30: #{cls_model_forward.1} parent=11 // pred_check_branch
          %332 = sbr.rel (%p330) target = $region32
        $region31: #{cls_model_forward.1} parent=11 // pred_region
          _
        $region32: #{cls_model_forward.1} parent=11 // pred_fallthru
          _
        // Predicated region
        $region33: #{cls_model_forward.1} parent=11 // pred_check
          %p333 = pneg %p198
        $region34: #{cls_model_forward.1} parent=11 // pred_check_branch
          %335 = sbr.rel (%p333) target = $region36
        $region35: #{cls_model_forward.1} parent=11 // pred_region
          _
        $region36: #{cls_model_forward.1} parent=11 // pred_fallthru
          _
        // Predicated region
        $region37: #{cls_model_forward.1} parent=11 // pred_check
          %p336 = pneg %p219
        $region38: #{cls_model_forward.1} parent=11 // pred_check_branch
          %338 = sbr.rel (%p336) target = $region40
        $region39: #{cls_model_forward.1} parent=11 // pred_region
          %s340 = ssub.s32 4096, 4096
          %341 = vsyncadd [#allocation4], %s340
          %s342 = sshll.u32 [#allocation3], 4
          %s343 = int_to_ptr.vmem [resolvable:$true] %s342
          %348 = dma.hbm_to_vmem [thread:$0]  %s8, 4096, %s343, [#allocation4], 256, 256, 16
        $region40: #{cls_model_forward.1} parent=11 // pred_fallthru
          _
        // Predicated region
        $region41: #{cls_model_forward.1} parent=11 // pred_check
          %p349 = pneg %p240
        $region42: #{cls_model_forward.1} parent=11 // pred_check_branch
          %351 = sbr.rel (%p349) target = $region44
        $region43: #{cls_model_forward.1} parent=11 // pred_region
          _
        $region44: #{cls_model_forward.1} parent=11 // pred_fallthru
          _
        // Predicated region
        $region45: #{cls_model_forward.1} parent=11 // pred_check
          %p352 = pneg %p261
        $region46: #{cls_model_forward.1} parent=11 // pred_check_branch
          %354 = sbr.rel (%p352) target = $region48
        $region47: #{cls_model_forward.1} parent=11 // pred_region
          %s356 = ssub.s32 4096, 4096
          %357 = vsyncadd [#allocation6], %s356
          %s358 = sshll.u32 [#allocation5], 4
          %s359 = int_to_ptr.vmem [resolvable:$true] %s358
          %364 = dma.hbm_to_vmem [thread:$0]  %s10, 4096, %s359, [#allocation6], 128, 128, 8
        $region48: #{cls_model_forward.1} parent=11 // pred_fallthru
          _
        // Predicated region
        $region49: #{cls_model_forward.1} parent=11 // pred_check
          %p365 = pneg %p282
        $region50: #{cls_model_forward.1} parent=11 // pred_check_branch
          %367 = sbr.rel (%p365) target = $region52
        $region51: #{cls_model_forward.1} parent=11 // pred_region
          _
        $region52: #{cls_model_forward.1} parent=11 // pred_fallthru
          _
      $region12: #{cls_model_forward.1} parent=5 // pred_fallthru
        _
      %p368 = scmp.lt.s32.totalorder %s20, 2
      // Predicated region
      $region53: #{cls_model_forward.1} parent=5 // pred_check
        %p369 = pneg %p368
      $region54: #{cls_model_forward.1} parent=5 // pred_check_branch
        %371 = sbr.rel (%p369) target = $region56
      $region55: #{cls_model_forward.1} parent=5 // pred_region
        // Predicated region
        $region57: #{cls_model_forward.1} parent=55 // pred_check
          %p372 = pneg %p40
        $region58: #{cls_model_forward.1} parent=55 // pred_check_branch
          %374 = sbr.rel (%p372) target = $region60
        $region59: #{cls_model_forward.1} parent=55 // pred_region
          %s375 = smul.u32 4, %s20
          %p376 = scmp.lt.s32.totalorder %s375, 7
          %s377 = scalar_select %p376, %s375, 7
          %s378 = smul.addr %s377, 4
          %s379 = scalar_lea.vmem %s0, %s378
          %s380 = smul.u32 4, %s20
        $region60: #{cls_model_forward.1} parent=55 // pred_fallthru
          _
        // Predicated region
        $region61: #{cls_model_forward.1} parent=55 // pred_check
          %p381 = pneg %p66
        $region62: #{cls_model_forward.1} parent=55 // pred_check_branch
          %383 = sbr.rel (%p381) target = $region64
        $region63: #{cls_model_forward.1} parent=55 // pred_region
          %s384 = smul.u32 64, %s20
          %p385 = scmp.lt.s32.totalorder %s384, 127
          %s386 = scalar_select %p385, %s384, 127
          %s387 = smul.addr %s386, 4
          %s388 = scalar_lea.vmem %s1, %s387
          %s389 = smul.u32 64, %s20
        $region64: #{cls_model_forward.1} parent=55 // pred_fallthru
          _
      $region56: #{cls_model_forward.1} parent=5 // pred_fallthru
        _
      %p390 = scmp.le.s32.totalorder 1, %s20
      %p391 = scmp.lt.s32.totalorder %s20, 3
      %p392 = pnand %p390, %p391
      %p393 = pneg %p392
      // Predicated region
      $region65: #{cls_model_forward.1} parent=5 // pred_check
        _
      $region66: #{cls_model_forward.1} parent=5 // pred_check_branch
        %395 = sbr.rel (%p392) target = $region68
      $region67: #{cls_model_forward.1} parent=5 // pred_region
        %s396 = ssub.s32 %s20, 1
        // Predicated region
        $region69: #{cls_model_forward.1} parent=67 // pred_check
          %p397 = pneg %p219
        $region70: #{cls_model_forward.1} parent=67 // pred_check_branch
          %399 = sbr.rel (%p397) target = $region72
        $region71: #{cls_model_forward.1} parent=67 // pred_region
          %400 = dma.done [#allocation4], 4096
        $region72: #{cls_model_forward.1} parent=67 // pred_fallthru
          _
        // Predicated region
        $region73: #{cls_model_forward.1} parent=67 // pred_check
          %p401 = pneg %p261
        $region74: #{cls_model_forward.1} parent=67 // pred_check_branch
          %403 = sbr.rel (%p401) target = $region76
        $region75: #{cls_model_forward.1} parent=67 // pred_region
          %404 = dma.done [#allocation6], 4096
        $region76: #{cls_model_forward.1} parent=67 // pred_fallthru
          _
        %s405 = smul.u32 4, %s25
        %p406 = scmp.lt.s32.totalorder %s405, 7
        %s407 = scalar_select %p406, %s405, 7
        %s408 = smul.addr %s407, 4
        %s409 = scalar_lea.vmem %s0, %s408
        %p410 = pneg %p46
        %p411 = pneg %p43
        %s412 = smul.u32 64, %s25
        %p413 = scmp.lt.s32.totalorder %s412, 127
        %s414 = scalar_select %p413, %s412, 127
        %s415 = smul.addr %s414, 4
        %s416 = scalar_lea.vmem %s1, %s415
        %p417 = pneg %p72
        %p418 = pneg %p69
        %p419 = pneg %p93
        %p420 = pneg %p90
        %p421 = pneg %p114
        %p422 = pneg %p111
        %p423 = pneg %p135
        %p424 = pneg %p132
        %p425 = pneg %p156
        %p426 = pneg %p153
        %p427 = pneg %p177
        %p428 = pneg %p174
        %p429 = pneg %p198
        %p430 = pneg %p195
        %p431 = pneg %p219
        %p432 = pneg %p216
        %p433 = pneg %p240
        %p434 = pneg %p237
        %p435 = pneg %p261
        %p436 = pneg %p258
        %p437 = pneg %p282
        %p438 = pneg %p279
        %p439 = pneg %p303
        %p440 = pneg %p300
        %s441 = smul.u32 4, %s25
        %p442 = scmp.lt.s32.totalorder %s441, 7
        %s443 = scalar_select %p442, %s441, 7
        %s444 = smul.addr %s443, 4
        %s445 = scalar_lea.vmem %s0, %s444
        %s446 = smul.u32 4, %s25
        %s447 = smul.u32 64, %s25
        %p448 = scmp.lt.s32.totalorder %s447, 127
        %s449 = scalar_select %p448, %s447, 127
        %s450 = smul.addr %s449, 4
        %s451 = scalar_lea.vmem %s1, %s450
        %s452 = smul.u32 64, %s25
        %p454 = scmp.eq.s32.totalorder %s25, 0
        // Predicated region
        $region77: #{cls_model_forward.1} parent=67 // pred_check
          %p455 = pneg %p454
        $region78: #{cls_model_forward.1} parent=67 // pred_check_branch
          %457 = sbr.rel (%p455) target = $region80
        $region79: #{cls_model_forward.1} parent=67 // pred_region
          %458 = vst [vmem:[#allocation2] sm:$0xff] 0.0
        $region80: #{cls_model_forward.1} parent=67 // pred_fallthru
          _
        %v459 = vld [vmem:[#allocation2] sm:$0xff]
        %v460 = vld [vmem:[%s445] sm:$0xff]
        %v461 = vld [vmem:[%s445 + $0x8] sm:$0xff]
        %v462 = vld [vmem:[%s451] sm:$0xf]
        %v463 = vld [vmem:[%s451 + $0x4] sm:$0xf]
        %v464 = vld [vmem:[%s451 + $0x8] sm:$0xf]
        %v465 = vld [vmem:[%s451 + $0xc] sm:$0xf]
        %v466 = vld [vmem:[%s451 + $0x10] sm:$0xf]
        %v467 = vld [vmem:[%s451 + $0x14] sm:$0xf]
        %v468 = vld [vmem:[%s451 + $0x18] sm:$0xf]
        %v469 = vld [vmem:[%s451 + $0x1c] sm:$0xf]
        %v470 = vld [vmem:[%s451 + $0x20] sm:$0xf]
        %v471 = vld [vmem:[%s451 + $0x24] sm:$0xf]
        %v472 = vld [vmem:[%s451 + $0x28] sm:$0xf]
        %v473 = vld [vmem:[%s451 + $0x2c] sm:$0xf]
        %v474 = vld [vmem:[%s451 + $0x30] sm:$0xf]
        %v475 = vld [vmem:[%s451 + $0x34] sm:$0xf]
        %v476 = vld [vmem:[%s451 + $0x38] sm:$0xf]
        %v477 = vld [vmem:[%s451 + $0x3c] sm:$0xf]
        %v478 = vld [vmem:[%s451 + $0x40] sm:$0xf]
        %v479 = vld [vmem:[%s451 + $0x44] sm:$0xf]
        %v480 = vld [vmem:[%s451 + $0x48] sm:$0xf]
        %v481 = vld [vmem:[%s451 + $0x4c] sm:$0xf]
        %v482 = vld [vmem:[%s451 + $0x50] sm:$0xf]
        %v483 = vld [vmem:[%s451 + $0x54] sm:$0xf]
        %v484 = vld [vmem:[%s451 + $0x58] sm:$0xf]
        %v485 = vld [vmem:[%s451 + $0x5c] sm:$0xf]
        %v486 = vld [vmem:[%s451 + $0x60] sm:$0xf]
        %v487 = vld [vmem:[%s451 + $0x64] sm:$0xf]
        %v488 = vld [vmem:[%s451 + $0x68] sm:$0xf]
        %v489 = vld [vmem:[%s451 + $0x6c] sm:$0xf]
        %v490 = vld [vmem:[%s451 + $0x70] sm:$0xf]
        %v491 = vld [vmem:[%s451 + $0x74] sm:$0xf]
        %v492 = vld [vmem:[%s451 + $0x78] sm:$0xf]
        %v493 = vld [vmem:[%s451 + $0x7c] sm:$0xf]
        %v494 = vld [vmem:[%s451 + $0x80] sm:$0xf]
        %v495 = vld [vmem:[%s451 + $0x84] sm:$0xf]
        %v496 = vld [vmem:[%s451 + $0x88] sm:$0xf]
        %v497 = vld [vmem:[%s451 + $0x8c] sm:$0xf]
        %v498 = vld [vmem:[%s451 + $0x90] sm:$0xf]
        %v499 = vld [vmem:[%s451 + $0x94] sm:$0xf]
        %v500 = vld [vmem:[%s451 + $0x98] sm:$0xf]
        %v501 = vld [vmem:[%s451 + $0x9c] sm:$0xf]
        %v502 = vld [vmem:[%s451 + $0xa0] sm:$0xf]
        %v503 = vld [vmem:[%s451 + $0xa4] sm:$0xf]
        %v504 = vld [vmem:[%s451 + $0xa8] sm:$0xf]
        %v505 = vld [vmem:[%s451 + $0xac] sm:$0xf]
        %v506 = vld [vmem:[%s451 + $0xb0] sm:$0xf]
        %v507 = vld [vmem:[%s451 + $0xb4] sm:$0xf]
        %v508 = vld [vmem:[%s451 + $0xb8] sm:$0xf]
        %v509 = vld [vmem:[%s451 + $0xbc] sm:$0xf]
        %v510 = vld [vmem:[%s451 + $0xc0] sm:$0xf]
        %v511 = vld [vmem:[%s451 + $0xc4] sm:$0xf]
        %v512 = vld [vmem:[%s451 + $0xc8] sm:$0xf]
        %v513 = vld [vmem:[%s451 + $0xcc] sm:$0xf]
        %v514 = vld [vmem:[%s451 + $0xd0] sm:$0xf]
        %v515 = vld [vmem:[%s451 + $0xd4] sm:$0xf]
        %v516 = vld [vmem:[%s451 + $0xd8] sm:$0xf]
        %v517 = vld [vmem:[%s451 + $0xdc] sm:$0xf]
        %v518 = vld [vmem:[%s451 + $0xe0] sm:$0xf]
        %v519 = vld [vmem:[%s451 + $0xe4] sm:$0xf]
        %v520 = vld [vmem:[%s451 + $0xe8] sm:$0xf]
        %v521 = vld [vmem:[%s451 + $0xec] sm:$0xf]
        %v522 = vld [vmem:[%s451 + $0xf0] sm:$0xf]
        %v523 = vld [vmem:[%s451 + $0xf4] sm:$0xf]
        %v524 = vld [vmem:[%s451 + $0xf8] sm:$0xf]
        %v525 = vld [vmem:[%s451 + $0xfc] sm:$0xf]
        %v528 = vunpack.c.l.b16 %v460
        %v529 = vunpack.c.h.b16 %v460
        %v530 = vunpack.c.l.b16 %v461
        %v531 = vunpack.c.h.b16 %v461
        %v532 = vpack.c.b16 %v528, %v528
        %v533 = vpack.c.b16 %v529, %v529
        %v534 = vpack.c.b16 %v530, %v530
        %v535 = vpack.c.b16 %v531, %v531
        %v604 = vunpack.c.l.b16 %v462
        %v605 = vunpack.c.l.b16 %v463
        %v606 = vunpack.c.l.b16 %v464
        %v607 = vunpack.c.l.b16 %v465
        %v608 = vunpack.c.l.b16 %v466
        %v609 = vunpack.c.l.b16 %v467
        %v610 = vunpack.c.l.b16 %v468
        %v611 = vunpack.c.l.b16 %v469
        %v612 = vunpack.c.l.b16 %v470
        %v613 = vunpack.c.l.b16 %v471
        %v614 = vunpack.c.l.b16 %v472
        %v615 = vunpack.c.l.b16 %v473
        %v616 = vunpack.c.l.b16 %v474
        %v617 = vunpack.c.l.b16 %v475
        %v618 = vunpack.c.l.b16 %v476
        %v619 = vunpack.c.l.b16 %v477
        %v620 = vunpack.c.l.b16 %v478
        %v621 = vunpack.c.l.b16 %v479
        %v622 = vunpack.c.l.b16 %v480
        %v623 = vunpack.c.l.b16 %v481
        %v624 = vunpack.c.l.b16 %v482
        %v625 = vunpack.c.l.b16 %v483
        %v626 = vunpack.c.l.b16 %v484
        %v627 = vunpack.c.l.b16 %v485
        %v628 = vunpack.c.l.b16 %v486
        %v629 = vunpack.c.l.b16 %v487
        %v630 = vunpack.c.l.b16 %v488
        %v631 = vunpack.c.l.b16 %v489
        %v632 = vunpack.c.l.b16 %v490
        %v633 = vunpack.c.l.b16 %v491
        %v634 = vunpack.c.l.b16 %v492
        %v635 = vunpack.c.l.b16 %v493
        %v636 = vunpack.c.l.b16 %v494
        %v637 = vunpack.c.l.b16 %v495
        %v638 = vunpack.c.l.b16 %v496
        %v639 = vunpack.c.l.b16 %v497
        %v640 = vunpack.c.l.b16 %v498
        %v641 = vunpack.c.l.b16 %v499
        %v642 = vunpack.c.l.b16 %v500
        %v643 = vunpack.c.l.b16 %v501
        %v644 = vunpack.c.l.b16 %v502
        %v645 = vunpack.c.l.b16 %v503
        %v646 = vunpack.c.l.b16 %v504
        %v647 = vunpack.c.l.b16 %v505
        %v648 = vunpack.c.l.b16 %v506
        %v649 = vunpack.c.l.b16 %v507
        %v650 = vunpack.c.l.b16 %v508
        %v651 = vunpack.c.l.b16 %v509
        %v652 = vunpack.c.l.b16 %v510
        %v653 = vunpack.c.l.b16 %v511
        %v654 = vunpack.c.l.b16 %v512
        %v655 = vunpack.c.l.b16 %v513
        %v656 = vunpack.c.l.b16 %v514
        %v657 = vunpack.c.l.b16 %v515
        %v658 = vunpack.c.l.b16 %v516
        %v659 = vunpack.c.l.b16 %v517
        %v660 = vunpack.c.l.b16 %v518
        %v661 = vunpack.c.l.b16 %v519
        %v662 = vunpack.c.l.b16 %v520
        %v663 = vunpack.c.l.b16 %v521
        %v664 = vunpack.c.l.b16 %v522
        %v665 = vunpack.c.l.b16 %v523
        %v666 = vunpack.c.l.b16 %v524
        %v667 = vunpack.c.l.b16 %v525
        %v668 = vpack.c.b16 %v605, %v604
        %v669 = vpack.c.b16 %v607, %v606
        %v670 = vpack.c.b16 %v609, %v608
        %v671 = vpack.c.b16 %v611, %v610
        %v672 = vpack.c.b16 %v613, %v612
        %v673 = vpack.c.b16 %v615, %v614
        %v674 = vpack.c.b16 %v617, %v616
        %v675 = vpack.c.b16 %v619, %v618
        %v676 = vpack.c.b16 %v621, %v620
        %v677 = vpack.c.b16 %v623, %v622
        %v678 = vpack.c.b16 %v625, %v624
        %v679 = vpack.c.b16 %v627, %v626
        %v680 = vpack.c.b16 %v629, %v628
        %v681 = vpack.c.b16 %v631, %v630
        %v682 = vpack.c.b16 %v633, %v632
        %v683 = vpack.c.b16 %v635, %v634
        %v684 = vpack.c.b16 %v637, %v636
        %v685 = vpack.c.b16 %v639, %v638
        %v686 = vpack.c.b16 %v641, %v640
        %v687 = vpack.c.b16 %v643, %v642
        %v688 = vpack.c.b16 %v645, %v644
        %v689 = vpack.c.b16 %v647, %v646
        %v690 = vpack.c.b16 %v649, %v648
        %v691 = vpack.c.b16 %v651, %v650
        %v692 = vpack.c.b16 %v653, %v652
        %v693 = vpack.c.b16 %v655, %v654
        %v694 = vpack.c.b16 %v657, %v656
        %v695 = vpack.c.b16 %v659, %v658
        %v696 = vpack.c.b16 %v661, %v660
        %v697 = vpack.c.b16 %v663, %v662
        %v698 = vpack.c.b16 %v665, %v664
        %v699 = vpack.c.b16 %v667, %v666
        %732 = vmatprep.subr.bf16.mxu0 0
        %733 = vmatpush1.bf16.msra.mxu0 %v668
        %734 = vmatprep.subr.bf16.mxu0 0
        %735 = vmatpush1.bf16.msra.mxu0 %v669
        %736 = vmatprep.subr.bf16.mxu0 0
        %737 = vmatpush1.bf16.msra.mxu0 %v670
        %738 = vmatprep.subr.bf16.mxu0 0
        %739 = vmatpush1.bf16.msra.mxu0 %v671
        %740 = vmatprep.subr.bf16.mxu0 0
        %741 = vmatpush1.bf16.msra.mxu0 %v672
        %742 = vmatprep.subr.bf16.mxu0 0
        %743 = vmatpush1.bf16.msra.mxu0 %v673
        %744 = vmatprep.subr.bf16.mxu0 0
        %745 = vmatpush1.bf16.msra.mxu0 %v674
        %746 = vmatprep.subr.bf16.mxu0 0
        %747 = vmatpush1.bf16.msra.mxu0 %v675
        %748 = vmatprep.subr.bf16.mxu0 0
        %749 = vmatpush1.bf16.msra.mxu0 %v676
        %750 = vmatprep.subr.bf16.mxu0 0
        %751 = vmatpush1.bf16.msra.mxu0 %v677
        %752 = vmatprep.subr.bf16.mxu0 0
        %753 = vmatpush1.bf16.msra.mxu0 %v678
        %754 = vmatprep.subr.bf16.mxu0 0
        %755 = vmatpush1.bf16.msra.mxu0 %v679
        %756 = vmatprep.subr.bf16.mxu0 0
        %757 = vmatpush1.bf16.msra.mxu0 %v680
        %758 = vmatprep.subr.bf16.mxu0 0
        %759 = vmatpush1.bf16.msra.mxu0 %v681
        %760 = vmatprep.subr.bf16.mxu0 0
        %761 = vmatpush1.bf16.msra.mxu0 %v682
        %762 = vmatprep.subr.bf16.mxu0 0
        %763 = vmatpush1.bf16.msra.mxu0 %v683
        %764 = vmatprep.mubr.bf16.mxu0 %v533
        %765 = vmatmul.mubr.bf16.gmra.mrb[0].mxu0 %v532
        %v766 = vpop.f32.mrb[0].mxu0
        %v767 = vadd.f32 0.0, %v766
        %v768 = vpop.f32.mrb[0].mxu0
        %v769 = vpop.f32.mrb[0].mxu0
        %v770 = vpop.f32.mrb[0].mxu0
        %771 = vdwg.mxu0
        %772 = vmatprep.subr.bf16.mxu0 0
        %773 = vmatpush1.bf16.msra.mxu0 %v684
        %774 = vmatprep.subr.bf16.mxu0 0
        %775 = vmatpush1.bf16.msra.mxu0 %v685
        %776 = vmatprep.subr.bf16.mxu0 0
        %777 = vmatpush1.bf16.msra.mxu0 %v686
        %778 = vmatprep.subr.bf16.mxu0 0
        %779 = vmatpush1.bf16.msra.mxu0 %v687
        %780 = vmatprep.subr.bf16.mxu0 0
        %781 = vmatpush1.bf16.msra.mxu0 %v688
        %782 = vmatprep.subr.bf16.mxu0 0
        %783 = vmatpush1.bf16.msra.mxu0 %v689
        %784 = vmatprep.subr.bf16.mxu0 0
        %785 = vmatpush1.bf16.msra.mxu0 %v690
        %786 = vmatprep.subr.bf16.mxu0 0
        %787 = vmatpush1.bf16.msra.mxu0 %v691
        %788 = vmatprep.subr.bf16.mxu0 0
        %789 = vmatpush1.bf16.msra.mxu0 %v692
        %790 = vmatprep.subr.bf16.mxu0 0
        %791 = vmatpush1.bf16.msra.mxu0 %v693
        %792 = vmatprep.subr.bf16.mxu0 0
        %793 = vmatpush1.bf16.msra.mxu0 %v694
        %794 = vmatprep.subr.bf16.mxu0 0
        %795 = vmatpush1.bf16.msra.mxu0 %v695
        %796 = vmatprep.subr.bf16.mxu0 0
        %797 = vmatpush1.bf16.msra.mxu0 %v696
        %798 = vmatprep.subr.bf16.mxu0 0
        %799 = vmatpush1.bf16.msra.mxu0 %v697
        %800 = vmatprep.subr.bf16.mxu0 0
        %801 = vmatpush1.bf16.msra.mxu0 %v698
        %802 = vmatprep.subr.bf16.mxu0 0
        %803 = vmatpush1.bf16.msra.mxu0 %v699
        %804 = vmatprep.mubr.bf16.mxu0 %v535
        %805 = vmatmul.mubr.bf16.gmra.mrb[0].mxu0 %v534
        %v806 = vpop.f32.mrb[0].mxu0
        %v807 = vadd.f32 %v767, %v806
        %v808 = vpop.f32.mrb[0].mxu0
        %v809 = vpop.f32.mrb[0].mxu0
        %v810 = vpop.f32.mrb[0].mxu0
        %811 = vdwg.mxu0
        %v812 = vadd.f32 %v459, %v807
        %813 = vst [vmem:[#allocation2] sm:$0xff] %v812
        %p814 = scmp.eq.s32.totalorder %s25, 1
        // Predicated region
        $region81: #{cls_model_forward.1} parent=67 // pred_check
          %p815 = pneg %p814
        $region82: #{cls_model_forward.1} parent=67 // pred_check_branch
          %817 = sbr.rel (%p815) target = $region84
        $region83: #{cls_model_forward.1} parent=67 // pred_region
          %v818 = vld [vmem:[#allocation2] sm:$0xff]
          %v819 = vld [vmem:[%s2] sm:$0x1]
          %v821 = vlaneseq
          %v822 = vshrl.u32 %v821, 7
          %v823 = vsub.s32 0, %v822
          %v824 = vrot.slane %v819, %v823
          %v826 = vadd.f32 %v818, %v824
          %v827 = vld [vmem:[%s3] sm:$0xff]
          %v828 = vld [vmem:[%s3 + $0x8] sm:$0xff]
          %v829 = vld [vmem:[%s5] sm:$0xff]
          %v830 = vld [vmem:[%s5 + $0x8] sm:$0xff]
          %v831 = vld [vmem:[%s5 + $0x10] sm:$0xff]
          %v832 = vld [vmem:[%s5 + $0x18] sm:$0xff]
          %v833 = vld [vmem:[%s5 + $0x20] sm:$0xff]
          %v834 = vld [vmem:[%s5 + $0x28] sm:$0xff]
          %v835 = vld [vmem:[%s5 + $0x30] sm:$0xff]
          %v836 = vld [vmem:[%s5 + $0x38] sm:$0xff]
          %v837 = vld [vmem:[%s5 + $0x40] sm:$0xff]
          %v838 = vld [vmem:[%s5 + $0x48] sm:$0xff]
          %v839 = vld [vmem:[%s5 + $0x50] sm:$0xff]
          %v840 = vld [vmem:[%s5 + $0x58] sm:$0xff]
          %v841 = vld [vmem:[%s5 + $0x60] sm:$0xff]
          %v842 = vld [vmem:[%s5 + $0x68] sm:$0xff]
          %v843 = vld [vmem:[%s5 + $0x70] sm:$0xff]
          %v844 = vld [vmem:[%s5 + $0x78] sm:$0xff]
          %v845 = vld [vmem:[%s5 + $0x80] sm:$0xff]
          %v846 = vld [vmem:[%s5 + $0x88] sm:$0xff]
          %v847 = vld [vmem:[%s5 + $0x90] sm:$0xff]
          %v848 = vld [vmem:[%s5 + $0x98] sm:$0xff]
          %v849 = vld [vmem:[%s5 + $0xa0] sm:$0xff]
          %v850 = vld [vmem:[%s5 + $0xa8] sm:$0xff]
          %v851 = vld [vmem:[%s5 + $0xb0] sm:$0xff]
          %v852 = vld [vmem:[%s5 + $0xb8] sm:$0xff]
          %v853 = vld [vmem:[%s5 + $0xc0] sm:$0xff]
          %v854 = vld [vmem:[%s5 + $0xc8] sm:$0xff]
          %v855 = vld [vmem:[%s5 + $0xd0] sm:$0xff]
          %v856 = vld [vmem:[%s5 + $0xd8] sm:$0xff]
          %v857 = vld [vmem:[%s5 + $0xe0] sm:$0xff]
          %v858 = vld [vmem:[%s5 + $0xe8] sm:$0xff]
          %v859 = vld [vmem:[%s5 + $0xf0] sm:$0xff]
          %v860 = vld [vmem:[%s5 + $0xf8] sm:$0xff]
          %v861 = vld [vmem:[%s6] sm:$0x1]
          %v863 = vlaneseq
          %v864 = vshrl.u32 %v863, 7
          %v865 = vsub.s32 0, %v864
          %v866 = vrot.slane %v861, %v865
          %868 = vmatprep.subr.mxu0 0.0
          %869 = vmatpush1.msra.mxu0 %v829
          %870 = vmatprep.subr.mxu0 0.0
          %871 = vmatpush1.msra.mxu0 %v830
          %872 = vmatprep.subr.mxu0 0.0
          %873 = vmatpush1.msra.mxu0 %v831
          %874 = vmatprep.subr.mxu0 0.0
          %875 = vmatpush1.msra.mxu0 %v832
          %876 = vmatprep.subr.mxu0 0.0
          %877 = vmatpush1.msra.mxu0 %v833
          %878 = vmatprep.subr.mxu0 0.0
          %879 = vmatpush1.msra.mxu0 %v834
          %880 = vmatprep.subr.mxu0 0.0
          %881 = vmatpush1.msra.mxu0 %v835
          %882 = vmatprep.subr.mxu0 0.0
          %883 = vmatpush1.msra.mxu0 %v836
          %884 = vmatprep.subr.mxu0 0.0
          %885 = vmatpush1.msra.mxu0 %v837
          %886 = vmatprep.subr.mxu0 0.0
          %887 = vmatpush1.msra.mxu0 %v838
          %888 = vmatprep.subr.mxu0 0.0
          %889 = vmatpush1.msra.mxu0 %v839
          %890 = vmatprep.subr.mxu0 0.0
          %891 = vmatpush1.msra.mxu0 %v840
          %892 = vmatprep.subr.mxu0 0.0
          %893 = vmatpush1.msra.mxu0 %v841
          %894 = vmatprep.subr.mxu0 0.0
          %895 = vmatpush1.msra.mxu0 %v842
          %896 = vmatprep.subr.mxu0 0.0
          %897 = vmatpush1.msra.mxu0 %v843
          %898 = vmatprep.subr.mxu0 0.0
          %899 = vmatpush1.msra.mxu0 %v844
          %900 = vmatprep.subr.mxu0 0.0
          %901 = vmatpush1.msra.mxu0 %v845
          %902 = vmatprep.subr.mxu0 0.0
          %903 = vmatpush1.msra.mxu0 %v846
          %904 = vmatprep.subr.mxu0 0.0
          %905 = vmatpush1.msra.mxu0 %v847
          %906 = vmatprep.subr.mxu0 0.0
          %907 = vmatpush1.msra.mxu0 %v848
          %908 = vmatprep.subr.mxu0 0.0
          %909 = vmatpush1.msra.mxu0 %v849
          %910 = vmatprep.subr.mxu0 0.0
          %911 = vmatpush1.msra.mxu0 %v850
          %912 = vmatprep.subr.mxu0 0.0
          %913 = vmatpush1.msra.mxu0 %v851
          %914 = vmatprep.subr.mxu0 0.0
          %915 = vmatpush1.msra.mxu0 %v852
          %916 = vmatprep.subr.mxu0 0.0
          %917 = vmatpush1.msra.mxu0 %v853
          %918 = vmatprep.subr.mxu0 0.0
          %919 = vmatpush1.msra.mxu0 %v854
          %920 = vmatprep.subr.mxu0 0.0
          %921 = vmatpush1.msra.mxu0 %v855
          %922 = vmatprep.subr.mxu0 0.0
          %923 = vmatpush1.msra.mxu0 %v856
          %924 = vmatprep.subr.mxu0 0.0
          %925 = vmatpush1.msra.mxu0 %v857
          %926 = vmatprep.subr.mxu0 0.0
          %927 = vmatpush1.msra.mxu0 %v858
          %928 = vmatprep.subr.mxu0 0.0
          %929 = vmatpush1.msra.mxu0 %v859
          %930 = vmatprep.subr.mxu0 0.0
          %931 = vmatpush1.msra.mxu0 %v860
          %932 = vmatprep.mubr.f32.mxu0 %v828
          %933 = vmatmul.mubr.f32.gmra.mrb[0].mxu0 %v827
          %v934 = vpop.f32.mrb[0].mxu0
          %v935 = vadd.f32 %v866, %v934
          %v936 = vpop.f32.mrb[0].mxu0
          %937 = vdwg.mxu0
          %v938 = vld [vmem:[%s4] sm:$0xff]
          %vm939 = vcmask 64512
          %v941 = vsel %vm939, %v938, 0
          %943 = vmatprep.subr.mxu0 0.0
          %944 = vmatpush1.msra.mxu0 %v935
          %945 = vmatprep.subr.mxu0 0.0
          %946 = vmatpush1.msra.mxu0 0.0
          %947 = vmatprep.subr.mxu0 0.0
          %948 = vmatpush1.msra.mxu0 0.0
          %949 = vmatprep.subr.mxu0 0.0
          %950 = vmatpush1.msra.mxu0 0.0
          %951 = vmatprep.subr.mxu0 0.0
          %952 = vmatpush1.msra.mxu0 0.0
          %953 = vmatprep.subr.mxu0 0.0
          %954 = vmatpush1.msra.mxu0 0.0
          %955 = vmatprep.subr.mxu0 0.0
          %956 = vmatpush1.msra.mxu0 0.0
          %957 = vmatprep.subr.mxu0 0.0
          %958 = vmatpush1.msra.mxu0 0.0
          %959 = vmatprep.subr.mxu0 0.0
          %960 = vmatpush1.msra.mxu0 0.0
          %961 = vmatprep.subr.mxu0 0.0
          %962 = vmatpush1.msra.mxu0 0.0
          %963 = vmatprep.subr.mxu0 0.0
          %964 = vmatpush1.msra.mxu0 0.0
          %965 = vmatprep.subr.mxu0 0.0
          %966 = vmatpush1.msra.mxu0 0.0
          %967 = vmatprep.subr.mxu0 0.0
          %968 = vmatpush1.msra.mxu0 0.0
          %969 = vmatprep.subr.mxu0 0.0
          %970 = vmatpush1.msra.mxu0 0.0
          %971 = vmatprep.subr.mxu0 0.0
          %972 = vmatpush1.msra.mxu0 0.0
          %973 = vmatprep.subr.mxu0 0.0
          %974 = vmatpush1.msra.mxu0 0.0
          %975 = vmatprep.subr.mxu0 0.0
          %976 = vmatpush1.msra.mxu0 0.0
          %977 = vmatprep.subr.mxu0 0.0
          %978 = vmatpush1.msra.mxu0 0.0
          %979 = vmatprep.subr.mxu0 0.0
          %980 = vmatpush1.msra.mxu0 0.0
          %981 = vmatprep.subr.mxu0 0.0
          %982 = vmatpush1.msra.mxu0 0.0
          %983 = vmatprep.subr.mxu0 0.0
          %984 = vmatpush1.msra.mxu0 0.0
          %985 = vmatprep.subr.mxu0 0.0
          %986 = vmatpush1.msra.mxu0 0.0
          %987 = vmatprep.subr.mxu0 0.0
          %988 = vmatpush1.msra.mxu0 0.0
          %989 = vmatprep.subr.mxu0 0.0
          %990 = vmatpush1.msra.mxu0 0.0
          %991 = vmatprep.subr.mxu0 0.0
          %992 = vmatpush1.msra.mxu0 0.0
          %993 = vmatprep.subr.mxu0 0.0
          %994 = vmatpush1.msra.mxu0 0.0
          %995 = vmatprep.subr.mxu0 0.0
          %996 = vmatpush1.msra.mxu0 0.0
          %997 = vmatprep.subr.mxu0 0.0
          %998 = vmatpush1.msra.mxu0 0.0
          %999 = vmatprep.subr.mxu0 0.0
          %1000 = vmatpush1.msra.mxu0 0.0
          %1001 = vmatprep.subr.mxu0 0.0
          %1002 = vmatpush1.msra.mxu0 0.0
          %1003 = vmatprep.subr.mxu0 0.0
          %1004 = vmatpush1.msra.mxu0 0.0
          %1005 = vmatprep.subr.mxu0 0.0
          %1006 = vmatpush1.msra.mxu0 0.0
          %1007 = vmatprep.mubr.f32.mxu0 0.0
          %1008 = vmatmul.mubr.f32.gmra.mrb[0].mxu0 %v941
          %v1009 = vpop.f32.mrb[0].mxu0
          %v1010 = vadd.f32 0.0, %v1009
          %v1011 = vpop.f32.mrb[0].mxu0
          %1012 = vdwg.mxu0
          %v1013 = vld [vmem:[%s7] sm:$0xff]
          %v1014 = vld [vmem:[%s7 + $0x8] sm:$0xff]
          %v1015 = vld [vmem:[%s7 + $0x10] sm:$0xff]
          %v1016 = vld [vmem:[%s7 + $0x18] sm:$0xff]
          %v1017 = vld [vmem:[%s7 + $0x20] sm:$0xff]
          %v1018 = vld [vmem:[%s7 + $0x28] sm:$0xff]
          %v1019 = vld [vmem:[%s7 + $0x30] sm:$0xff]
          %v1020 = vld [vmem:[%s7 + $0x38] sm:$0xff]
          %v1021 = vld [vmem:[%s7 + $0x40] sm:$0xff]
          %v1022 = vld [vmem:[%s7 + $0x48] sm:$0xff]
          %v1023 = vld [vmem:[%s7 + $0x50] sm:$0xff]
          %v1024 = vld [vmem:[%s7 + $0x58] sm:$0xff]
          %v1025 = vld [vmem:[%s7 + $0x60] sm:$0xff]
          %v1026 = vld [vmem:[%s7 + $0x68] sm:$0xff]
          %v1027 = vld [vmem:[%s7 + $0x70] sm:$0xff]
          %v1028 = vld [vmem:[%s7 + $0x78] sm:$0xff]
          %v1029 = vld [vmem:[%s7 + $0x80] sm:$0xff]
          %v1030 = vld [vmem:[%s7 + $0x88] sm:$0xff]
          %v1031 = vld [vmem:[%s7 + $0x90] sm:$0xff]
          %v1032 = vld [vmem:[%s7 + $0x98] sm:$0xff]
          %v1033 = vld [vmem:[%s7 + $0xa0] sm:$0xff]
          %v1034 = vld [vmem:[%s7 + $0xa8] sm:$0xff]
          %v1035 = vld [vmem:[%s7 + $0xb0] sm:$0xff]
          %v1036 = vld [vmem:[%s7 + $0xb8] sm:$0xff]
          %v1037 = vld [vmem:[%s7 + $0xc0] sm:$0xff]
          %v1038 = vld [vmem:[%s7 + $0xc8] sm:$0xff]
          %v1039 = vld [vmem:[%s7 + $0xd0] sm:$0xff]
          %v1040 = vld [vmem:[%s7 + $0xd8] sm:$0xff]
          %v1041 = vld [vmem:[%s7 + $0xe0] sm:$0xff]
          %v1042 = vld [vmem:[%s7 + $0xe8] sm:$0xff]
          %v1043 = vld [vmem:[%s7 + $0xf0] sm:$0xff]
          %v1044 = vld [vmem:[%s7 + $0xf8] sm:$0xff]
          %v1045 = vld [vmem:[#allocation3] sm:$0xff]
          %v1046 = vld [vmem:[#allocation3 + $0x8] sm:$0xff]
          %v1047 = vld [vmem:[#allocation3 + $0x10] sm:$0xff]
          %v1048 = vld [vmem:[#allocation3 + $0x18] sm:$0xff]
          %v1049 = vld [vmem:[#allocation3 + $0x20] sm:$0xff]
          %v1050 = vld [vmem:[#allocation3 + $0x28] sm:$0xff]
          %v1051 = vld [vmem:[#allocation3 + $0x30] sm:$0xff]
          %v1052 = vld [vmem:[#allocation3 + $0x38] sm:$0xff]
          %v1053 = vld [vmem:[#allocation3 + $0x40] sm:$0xff]
          %v1054 = vld [vmem:[#allocation3 + $0x48] sm:$0xff]
          %v1055 = vld [vmem:[#allocation3 + $0x50] sm:$0xff]
          %v1056 = vld [vmem:[#allocation3 + $0x58] sm:$0xff]
          %v1057 = vld [vmem:[#allocation3 + $0x60] sm:$0xff]
          %v1058 = vld [vmem:[#allocation3 + $0x68] sm:$0xff]
          %v1059 = vld [vmem:[#allocation3 + $0x70] sm:$0xff]
          %v1060 = vld [vmem:[#allocation3 + $0x78] sm:$0xff]
          %v1061 = vld [vmem:[#allocation3 + $0x80] sm:$0xff]
          %v1062 = vld [vmem:[#allocation3 + $0x88] sm:$0xff]
          %v1063 = vld [vmem:[#allocation3 + $0x90] sm:$0xff]
          %v1064 = vld [vmem:[#allocation3 + $0x98] sm:$0xff]
          %v1065 = vld [vmem:[#allocation3 + $0xa0] sm:$0xff]
          %v1066 = vld [vmem:[#allocation3 + $0xa8] sm:$0xff]
          %v1067 = vld [vmem:[#allocation3 + $0xb0] sm:$0xff]
          %v1068 = vld [vmem:[#allocation3 + $0xb8] sm:$0xff]
          %v1069 = vld [vmem:[#allocation3 + $0xc0] sm:$0xff]
          %v1070 = vld [vmem:[#allocation3 + $0xc8] sm:$0xff]
          %v1071 = vld [vmem:[#allocation3 + $0xd0] sm:$0xff]
          %v1072 = vld [vmem:[#allocation3 + $0xd8] sm:$0xff]
          %v1073 = vld [vmem:[#allocation3 + $0xe0] sm:$0xff]
          %v1074 = vld [vmem:[#allocation3 + $0xe8] sm:$0xff]
          %v1075 = vld [vmem:[#allocation3 + $0xf0] sm:$0xff]
          %v1076 = vld [vmem:[#allocation3 + $0xf8] sm:$0xff]
          %1077 = vmatprep.subr.mxu0 %v1046
          %1078 = vmatpush1.msra.mxu0 %v1045
          %1079 = vmatprep.subr.mxu0 %v1048
          %1080 = vmatpush1.msra.mxu0 %v1047
          %1081 = vmatprep.subr.mxu0 %v1050
          %1082 = vmatpush1.msra.mxu0 %v1049
          %1083 = vmatprep.subr.mxu0 %v1052
          %1084 = vmatpush1.msra.mxu0 %v1051
          %1085 = vmatprep.subr.mxu0 %v1054
          %1086 = vmatpush1.msra.mxu0 %v1053
          %1087 = vmatprep.subr.mxu0 %v1056
          %1088 = vmatpush1.msra.mxu0 %v1055
          %1089 = vmatprep.subr.mxu0 %v1058
          %1090 = vmatpush1.msra.mxu0 %v1057
          %1091 = vmatprep.subr.mxu0 %v1060
          %1092 = vmatpush1.msra.mxu0 %v1059
          %1093 = vmatprep.subr.mxu0 %v1062
          %1094 = vmatpush1.msra.mxu0 %v1061
          %1095 = vmatprep.subr.mxu0 %v1064
          %1096 = vmatpush1.msra.mxu0 %v1063
          %1097 = vmatprep.subr.mxu0 %v1066
          %1098 = vmatpush1.msra.mxu0 %v1065
          %1099 = vmatprep.subr.mxu0 %v1068
          %1100 = vmatpush1.msra.mxu0 %v1067
          %1101 = vmatprep.subr.mxu0 %v1070
          %1102 = vmatpush1.msra.mxu0 %v1069
          %1103 = vmatprep.subr.mxu0 %v1072
          %1104 = vmatpush1.msra.mxu0 %v1071
          %1105 = vmatprep.subr.mxu0 %v1074
          %1106 = vmatpush1.msra.mxu0 %v1073
          %1107 = vmatprep.subr.mxu0 %v1076
          %1108 = vmatpush1.msra.mxu0 %v1075
          %1109 = vmatprep.subr.mxu0 0.0
          %1110 = vmatpush1.msra.mxu0 0.0
          %1111 = vmatprep.subr.mxu0 0.0
          %1112 = vmatpush1.msra.mxu0 0.0
          %1113 = vmatprep.subr.mxu0 0.0
          %1114 = vmatpush1.msra.mxu0 0.0
          %1115 = vmatprep.subr.mxu0 0.0
          %1116 = vmatpush1.msra.mxu0 0.0
          %1117 = vmatprep.subr.mxu0 0.0
          %1118 = vmatpush1.msra.mxu0 0.0
          %1119 = vmatprep.subr.mxu0 0.0
          %1120 = vmatpush1.msra.mxu0 0.0
          %1121 = vmatprep.subr.mxu0 0.0
          %1122 = vmatpush1.msra.mxu0 0.0
          %1123 = vmatprep.subr.mxu0 0.0
          %1124 = vmatpush1.msra.mxu0 0.0
          %1125 = vmatprep.subr.mxu0 0.0
          %1126 = vmatpush1.msra.mxu0 0.0
          %1127 = vmatprep.subr.mxu0 0.0
          %1128 = vmatpush1.msra.mxu0 0.0
          %1129 = vmatprep.subr.mxu0 0.0
          %1130 = vmatpush1.msra.mxu0 0.0
          %1131 = vmatprep.subr.mxu0 0.0
          %1132 = vmatpush1.msra.mxu0 0.0
          %1133 = vmatprep.subr.mxu0 0.0
          %1134 = vmatpush1.msra.mxu0 0.0
          %1135 = vmatprep.subr.mxu0 0.0
          %1136 = vmatpush1.msra.mxu0 0.0
          %1137 = vmatprep.subr.mxu0 0.0
          %1138 = vmatpush1.msra.mxu0 0.0
          %1139 = vmatprep.subr.mxu0 0.0
          %1140 = vmatpush1.msra.mxu0 0.0
          %1141 = vmatprep.mubr.f32.mxu0 0.0
          %1142 = vmatmul.mubr.f32.gmra.mrb[0].mxu0 %v1010
          %v1143 = vpop.f32.mrb[0].mxu0
          %v1144 = vadd.f32 0.0, %v1143
          %v1145 = vpop.f32.mrb[0].mxu0
          %v1146 = vadd.f32 0.0, %v1145
          %1147 = vdwg.mxu0
          %1148 = vmatprep.subr.mxu0 %v1014
          %1149 = vmatpush1.msra.mxu0 %v1013
          %1150 = vmatprep.subr.mxu0 %v1016
          %1151 = vmatpush1.msra.mxu0 %v1015
          %1152 = vmatprep.subr.mxu0 %v1018
          %1153 = vmatpush1.msra.mxu0 %v1017
          %1154 = vmatprep.subr.mxu0 %v1020
          %1155 = vmatpush1.msra.mxu0 %v1019
          %1156 = vmatprep.subr.mxu0 %v1022
          %1157 = vmatpush1.msra.mxu0 %v1021
          %1158 = vmatprep.subr.mxu0 %v1024
          %1159 = vmatpush1.msra.mxu0 %v1023
          %1160 = vmatprep.subr.mxu0 %v1026
          %1161 = vmatpush1.msra.mxu0 %v1025
          %1162 = vmatprep.subr.mxu0 %v1028
          %1163 = vmatpush1.msra.mxu0 %v1027
          %1164 = vmatprep.subr.mxu0 %v1030
          %1165 = vmatpush1.msra.mxu0 %v1029
          %1166 = vmatprep.subr.mxu0 %v1032
          %1167 = vmatpush1.msra.mxu0 %v1031
          %1168 = vmatprep.subr.mxu0 %v1034
          %1169 = vmatpush1.msra.mxu0 %v1033
          %1170 = vmatprep.subr.mxu0 %v1036
          %1171 = vmatpush1.msra.mxu0 %v1035
          %1172 = vmatprep.subr.mxu0 %v1038
          %1173 = vmatpush1.msra.mxu0 %v1037
          %1174 = vmatprep.subr.mxu0 %v1040
          %1175 = vmatpush1.msra.mxu0 %v1039
          %1176 = vmatprep.subr.mxu0 %v1042
          %1177 = vmatpush1.msra.mxu0 %v1041
          %1178 = vmatprep.subr.mxu0 %v1044
          %1179 = vmatpush1.msra.mxu0 %v1043
          %1180 = vmatprep.subr.mxu0 0.0
          %1181 = vmatpush1.msra.mxu0 0.0
          %1182 = vmatprep.subr.mxu0 0.0
          %1183 = vmatpush1.msra.mxu0 0.0
          %1184 = vmatprep.subr.mxu0 0.0
          %1185 = vmatpush1.msra.mxu0 0.0
          %1186 = vmatprep.subr.mxu0 0.0
          %1187 = vmatpush1.msra.mxu0 0.0
          %1188 = vmatprep.subr.mxu0 0.0
          %1189 = vmatpush1.msra.mxu0 0.0
          %1190 = vmatprep.subr.mxu0 0.0
          %1191 = vmatpush1.msra.mxu0 0.0
          %1192 = vmatprep.subr.mxu0 0.0
          %1193 = vmatpush1.msra.mxu0 0.0
          %1194 = vmatprep.subr.mxu0 0.0
          %1195 = vmatpush1.msra.mxu0 0.0
          %1196 = vmatprep.subr.mxu0 0.0
          %1197 = vmatpush1.msra.mxu0 0.0
          %1198 = vmatprep.subr.mxu0 0.0
          %1199 = vmatpush1.msra.mxu0 0.0
          %1200 = vmatprep.subr.mxu0 0.0
          %1201 = vmatpush1.msra.mxu0 0.0
          %1202 = vmatprep.subr.mxu0 0.0
          %1203 = vmatpush1.msra.mxu0 0.0
          %1204 = vmatprep.subr.mxu0 0.0
          %1205 = vmatpush1.msra.mxu0 0.0
          %1206 = vmatprep.subr.mxu0 0.0
          %1207 = vmatpush1.msra.mxu0 0.0
          %1208 = vmatprep.subr.mxu0 0.0
          %1209 = vmatpush1.msra.mxu0 0.0
          %1210 = vmatprep.subr.mxu0 0.0
          %1211 = vmatpush1.msra.mxu0 0.0
          %1212 = vmatprep.mubr.f32.mxu0 0.0
          %1213 = vmatmul.mubr.f32.gmra.mrb[0].mxu0 %v826
          %v1214 = vpop.f32.mrb[0].mxu0
          %v1215 = vadd.f32 %v1144, %v1214
          %v1216 = vpop.f32.mrb[0].mxu0
          %v1217 = vadd.f32 %v1146, %v1216
          %1218 = vdwg.mxu0
          %v1219 = vld [vmem:[%s9] sm:$0x3]
          %v1221 = vlaneseq
          %v1222 = vshrl.u32 %v1221, 7
          %v1223 = vsub.s32 0, %v1222
          %v1224 = vrot.slane %v1219, %v1223
          %v1225 = vlaneseq
          %v1226 = vshrl.u32 %v1225, 7
          %v1227 = vsub.s32 1, %v1226
          %v1228 = vrot.slane %v1219, %v1227
          %v1231 = vadd.f32 %v1215, %v1224
          %v1232 = vadd.f32 %v1217, %v1228
          %v1233 = vtanh.pop %v1231
          %v1234 = vtanh.pop %v1232
          %v1235 = vld [vmem:[#allocation5] sm:$0xff]
          %v1236 = vld [vmem:[#allocation5 + $0x8] sm:$0xff]
          %v1237 = vld [vmem:[#allocation5 + $0x10] sm:$0xff]
          %v1238 = vld [vmem:[#allocation5 + $0x18] sm:$0xff]
          %v1239 = vld [vmem:[#allocation5 + $0x20] sm:$0xff]
          %v1240 = vld [vmem:[#allocation5 + $0x28] sm:$0xff]
          %v1241 = vld [vmem:[#allocation5 + $0x30] sm:$0xff]
          %v1242 = vld [vmem:[#allocation5 + $0x38] sm:$0xff]
          %v1243 = vld [vmem:[#allocation5 + $0x40] sm:$0xff]
          %v1244 = vld [vmem:[#allocation5 + $0x48] sm:$0xff]
          %v1245 = vld [vmem:[#allocation5 + $0x50] sm:$0xff]
          %v1246 = vld [vmem:[#allocation5 + $0x58] sm:$0xff]
          %v1247 = vld [vmem:[#allocation5 + $0x60] sm:$0xff]
          %v1248 = vld [vmem:[#allocation5 + $0x68] sm:$0xff]
          %v1249 = vld [vmem:[#allocation5 + $0x70] sm:$0xff]
          %v1250 = vld [vmem:[#allocation5 + $0x78] sm:$0xff]
          %v1251 = vld [vmem:[#allocation5 + $0x80] sm:$0xff]
          %v1252 = vld [vmem:[#allocation5 + $0x88] sm:$0xff]
          %v1253 = vld [vmem:[#allocation5 + $0x90] sm:$0xff]
          %v1254 = vld [vmem:[#allocation5 + $0x98] sm:$0xff]
          %v1255 = vld [vmem:[#allocation5 + $0xa0] sm:$0xff]
          %v1256 = vld [vmem:[#allocation5 + $0xa8] sm:$0xff]
          %v1257 = vld [vmem:[#allocation5 + $0xb0] sm:$0xff]
          %v1258 = vld [vmem:[#allocation5 + $0xb8] sm:$0xff]
          %v1259 = vld [vmem:[#allocation5 + $0xc0] sm:$0xff]
          %v1260 = vld [vmem:[#allocation5 + $0xc8] sm:$0xff]
          %v1261 = vld [vmem:[#allocation5 + $0xd0] sm:$0xff]
          %v1262 = vld [vmem:[#allocation5 + $0xd8] sm:$0xff]
          %v1263 = vld [vmem:[#allocation5 + $0xe0] sm:$0xff]
          %v1264 = vld [vmem:[#allocation5 + $0xe8] sm:$0xff]
          %v1265 = vld [vmem:[#allocation5 + $0xf0] sm:$0xff]
          %v1266 = vld [vmem:[#allocation5 + $0xf8] sm:$0xff]
          %v1267 = vld [vmem:[%s11] sm:$0x1]
          %v1269 = vlaneseq
          %v1270 = vshrl.u32 %v1269, 7
          %v1271 = vsub.s32 0, %v1270
          %v1272 = vrot.slane %v1267, %v1271
          %1274 = vmatprep.subr.mxu0 0.0
          %1275 = vmatpush1.msra.mxu0 %v1235
          %1276 = vmatprep.subr.mxu0 0.0
          %1277 = vmatpush1.msra.mxu0 %v1236
          %1278 = vmatprep.subr.mxu0 0.0
          %1279 = vmatpush1.msra.mxu0 %v1237
          %1280 = vmatprep.subr.mxu0 0.0
          %1281 = vmatpush1.msra.mxu0 %v1238
          %1282 = vmatprep.subr.mxu0 0.0
          %1283 = vmatpush1.msra.mxu0 %v1239
          %1284 = vmatprep.subr.mxu0 0.0
          %1285 = vmatpush1.msra.mxu0 %v1240
          %1286 = vmatprep.subr.mxu0 0.0
          %1287 = vmatpush1.msra.mxu0 %v1241
          %1288 = vmatprep.subr.mxu0 0.0
          %1289 = vmatpush1.msra.mxu0 %v1242
          %1290 = vmatprep.subr.mxu0 0.0
          %1291 = vmatpush1.msra.mxu0 %v1243
          %1292 = vmatprep.subr.mxu0 0.0
          %1293 = vmatpush1.msra.mxu0 %v1244
          %1294 = vmatprep.subr.mxu0 0.0
          %1295 = vmatpush1.msra.mxu0 %v1245
          %1296 = vmatprep.subr.mxu0 0.0
          %1297 = vmatpush1.msra.mxu0 %v1246
          %1298 = vmatprep.subr.mxu0 0.0
          %1299 = vmatpush1.msra.mxu0 %v1247
          %1300 = vmatprep.subr.mxu0 0.0
          %1301 = vmatpush1.msra.mxu0 %v1248
          %1302 = vmatprep.subr.mxu0 0.0
          %1303 = vmatpush1.msra.mxu0 %v1249
          %1304 = vmatprep.subr.mxu0 0.0
          %1305 = vmatpush1.msra.mxu0 %v1250
          %1306 = vmatprep.subr.mxu0 0.0
          %1307 = vmatpush1.msra.mxu0 %v1251
          %1308 = vmatprep.subr.mxu0 0.0
          %1309 = vmatpush1.msra.mxu0 %v1252
          %1310 = vmatprep.subr.mxu0 0.0
          %1311 = vmatpush1.msra.mxu0 %v1253
          %1312 = vmatprep.subr.mxu0 0.0
          %1313 = vmatpush1.msra.mxu0 %v1254
          %1314 = vmatprep.subr.mxu0 0.0
          %1315 = vmatpush1.msra.mxu0 %v1255
          %1316 = vmatprep.subr.mxu0 0.0
          %1317 = vmatpush1.msra.mxu0 %v1256
          %1318 = vmatprep.subr.mxu0 0.0
          %1319 = vmatpush1.msra.mxu0 %v1257
          %1320 = vmatprep.subr.mxu0 0.0
          %1321 = vmatpush1.msra.mxu0 %v1258
          %1322 = vmatprep.subr.mxu0 0.0
          %1323 = vmatpush1.msra.mxu0 %v1259
          %1324 = vmatprep.subr.mxu0 0.0
          %1325 = vmatpush1.msra.mxu0 %v1260
          %1326 = vmatprep.subr.mxu0 0.0
          %1327 = vmatpush1.msra.mxu0 %v1261
          %1328 = vmatprep.subr.mxu0 0.0
          %1329 = vmatpush1.msra.mxu0 %v1262
          %1330 = vmatprep.subr.mxu0 0.0
          %1331 = vmatpush1.msra.mxu0 %v1263
          %1332 = vmatprep.subr.mxu0 0.0
          %1333 = vmatpush1.msra.mxu0 %v1264
          %1334 = vmatprep.subr.mxu0 0.0
          %1335 = vmatpush1.msra.mxu0 %v1265
          %1336 = vmatprep.subr.mxu0 0.0
          %1337 = vmatpush1.msra.mxu0 %v1266
          %1338 = vmatprep.mubr.f32.mxu0 %v1234
          %1339 = vmatmul.mubr.f32.gmra.mrb[0].mxu0 %v1233
          %v1340 = vpop.f32.mrb[0].mxu0
          %v1341 = vadd.f32 %v1272, %v1340
          %v1342 = vpop.f32.mrb[0].mxu0
          %1343 = vdwg.mxu0
          %1344 = vst [vmem:[%s12] sm:$0xff] %v1341
        $region84: #{cls_model_forward.1} parent=67 // pred_fallthru
          _
        // Predicated region
        $region85: #{cls_model_forward.1} parent=67 // pred_check
          %p1345 = pneg %p300
        $region86: #{cls_model_forward.1} parent=67 // pred_check_branch
          %1347 = sbr.rel (%p1345) target = $region88
        $region87: #{cls_model_forward.1} parent=67 // pred_region
          _
        $region88: #{cls_model_forward.1} parent=67 // pred_fallthru
          _
        // Predicated region
        $region89: #{cls_model_forward.1} parent=67 // pred_check
          %p1348 = pneg %p300
        $region90: #{cls_model_forward.1} parent=67 // pred_check_branch
          %1350 = sbr.rel (%p1348) target = $region92
        $region91: #{cls_model_forward.1} parent=67 // pred_region
          _
        $region92: #{cls_model_forward.1} parent=67 // pred_fallthru
          _
      $region68: #{cls_model_forward.1} parent=5 // pred_fallthru
        _
      %p1351 = scmp.le.s32.totalorder 2, %s20
      // Predicated region
      $region93: #{cls_model_forward.1} parent=5 // pred_check
        %p1352 = pneg %p1351
      $region94: #{cls_model_forward.1} parent=5 // pred_check_branch
        %1354 = sbr.rel (%p1352) target = $region96
      $region95: #{cls_model_forward.1} parent=5 // pred_region
        %s1355 = ssub.s32 %s20, 2
      $region96: #{cls_model_forward.1} parent=5 // pred_fallthru
        _
    $region6: #{cls_model_forward.1} parent=1 // loop_footer
      %s24 = sadd.s32 1, %s20
    $region7: #{cls_model_forward.1} parent=1 // loop_footer_branch
      %19 = sbr.rel target = $region3
    $region8: #{cls_model_forward.1} parent=1 // loop_exit
      _
    %1356 = vsyncpa [#allocation4], 1
    %s1357 = scalar_lea.sflag [#allocation4], 1
    %1358 = vsyncpa %s1357, 1
    %1359 = vsyncpa [#allocation6], 1

</llo_original>
